<compile_context>
chip_gen: v7x
topology: tpu7x:2x2x1
jax: 0.10.0
libtpu: 0.0.40
codegen_flags: <defaults>
</compile_context>

<pallas_src>
import functools
import math

import jax
import jax.numpy as jnp
from jax import lax
from jax.experimental import pallas as pl
from jax.experimental.pallas import tpu as pltpu

_NEG_INF = -1e30  # finite "-inf": avoids inf/nan arithmetic in the online softmax


def _round_up(x, m):
    return ((x + m - 1) // m) * m


# ----------------------------- Pallas kernel --------------------------------
def _attention_kernel(q_ref, k_ref, v_ref,
                      wq_ref, bq_ref, wk_ref, bk_ref, wo_ref, bo_ref,
                      o_ref,
                      qp_sc, m_sc, l_sc, acc_sc,
                      *, tl, l_actual, l_padded):
    """One (batch, T-tile, L-tile) grid step of flash-style decoder attention.

    q_ref  : (tq, Hp) bf16   raw query tile (PE already added, H zero-padded)
    k_ref  : (tl, Hp) bf16   raw key tile
    v_ref  : (tl, Hp) bf16   value tile
    w*_ref : (Hp, Hp) bf16   resident projection weights, pre-transposed (in, out)
    b*_ref : (1, Hp)  f32    biases
    o_ref  : (tq, Hp) f32    output tile (resident across the L axis)
    qp_sc  : (tq, Hp) bf16   projected-query scratch (computed once per T-tile)
    m_sc   : (tq, 1)  f32    running row max
    l_sc   : (tq, 1)  f32    running softmax denominator
    acc_sc : (tq, Hp) f32    running (unnormalized) context accumulator
    """
    li = pl.program_id(2)
    n_l = pl.num_programs(2)

    @pl.when(li == 0)
    def _init():
        # query_fc: one lane-dense MXU matmul per (b, T-tile); cast the f32
        # result to bf16 immediately (no duplicated f32 + bf16 copies kept).
        qp = jnp.dot(q_ref[...], wq_ref[...],
                     preferred_element_type=jnp.float32) + bq_ref[...]
        qp_sc[...] = qp.astype(jnp.bfloat16)
        m_sc[...] = jnp.full_like(m_sc, _NEG_INF)
        l_sc[...] = jnp.zeros_like(l_sc)
        acc_sc[...] = jnp.zeros_like(acc_sc)

    # key_fc for this L tile, cast to bf16 immediately.
    # TODO(synk): when T spans many tiles this recomputes the key projection
    # per T-tile; a separate key-projection pallas_call would avoid that.
    kp = (jnp.dot(k_ref[...], wk_ref[...],
                  preferred_element_type=jnp.float32) + bk_ref[...]
          ).astype(jnp.bfloat16)

    # scores = q_proj @ k_proj^T : contract the hidden axis directly so no
    # transpose of K is materialized (no XLU vxpose / extra VMEM copy).
    s = lax.dot_general(qp_sc[...], kp,
                        dimension_numbers=(((1,), (1,)), ((), ())),
                        preferred_element_type=jnp.float32)      # (tq, tl) f32

    if l_padded > l_actual:
        # Zero-padded key positions give score 0, not -inf: mask them out so
        # they do not inflate the softmax denominator.
        col = li * tl + lax.broadcasted_iota(jnp.int32, s.shape, 1)
        s = jnp.where(col < l_actual, s, _NEG_INF)

    # Online (streaming) softmax, all elementwise math in f32.
    m_new = jnp.maximum(m_sc[...], jnp.max(s, axis=-1, keepdims=True))
    alpha = jnp.exp(m_sc[...] - m_new)
    p = jnp.exp(s - m_new)
    l_sc[...] = alpha * l_sc[...] + jnp.sum(p, axis=-1, keepdims=True)
    # nn.Dropout is the identity at inference time.
    acc_sc[...] = alpha * acc_sc[...] + jnp.dot(
        p.astype(jnp.bfloat16), v_ref[...], preferred_element_type=jnp.float32)
    m_sc[...] = m_new

    @pl.when(li == n_l - 1)
    def _finalize():
        # Normalize with an approximate reciprocal (EUP slot, not a VALU div).
        ctx = acc_sc[...] * pl.reciprocal(l_sc[...], approx=True)
        # output_fc; the 1/sqrt(L) scale was folded into Wo by the wrapper.
        out = jnp.dot(ctx.astype(jnp.bfloat16), wo_ref[...],
                      preferred_element_type=jnp.float32) + bo_ref[...]
        o_ref[...] = out.astype(o_ref.dtype)


# ------------------------------ JAX glue -------------------------------------
def position_encoding(length, channels, position_rate, current_pos=0):
    """DeepVoice3-style sinusoidal PE, per-batch rate (B,) -> (B, length, channels)."""
    # TODO(synk): the reference `position_encoding` has a mismatched call
    # signature and no return value; this is a best-effort sinusoidal PE with
    # the speaker gate reduced to a per-batch (mean) position rate.
    position = (jnp.arange(length, dtype=jnp.float32)
                + jnp.asarray(current_pos, jnp.float32))
    factor = jnp.exp(-jnp.arange(channels, dtype=jnp.float32)
                     * jnp.log(jnp.float32(10000.0)) / (channels - 1))
    angles = (position_rate[:, None, None] * position[None, :, None]
              * factor[None, None, :])
    even = (jnp.arange(channels) % 2 == 0)[None, None, :]
    return jnp.where(even, jnp.sin(angles), jnp.cos(angles))


def _vmem_limit_bytes():
    # Generation-aware scoped-VMEM budget: ~48 MiB on v7x (64 MiB physical),
    # ~96 MiB on v5e/v6e (128 MiB physical; default scoped would be 16/32).
    try:
        cap = int(getattr(pltpu.get_tpu_info(), "vmem_capacity_bytes",
                          64 * 1024 * 1024))
    except Exception:
        cap = 64 * 1024 * 1024
    return int(max(32 * 1024 * 1024, min(cap * 3 // 4, 96 * 1024 * 1024)))


def attention_forward(query, keys, values, speaker_embedding, current_mel_pos,
                      params):
    B, T, H = query.shape
    _, L, _ = keys.shape
    assert values.shape == (B, L, H)

    # speakers[0] / speakers[1]: Linear + Sigmoid (tiny; plain JAX). Under jit
    # these, the PE add, padding and bf16 cast fuse into a single pass over
    # q/k/v feeding the pallas_call (one HBM round trip).
    speaker_key_weight = jax.nn.sigmoid(
        speaker_embedding @ params["spk0_w"].T + params["spk0_b"])
    # TODO(synk): `self.w_initial` is never defined in the reference __init__; use 1.0.
    speaker_key_weight = speaker_key_weight * 1.0
    speaker_query_weight = jax.nn.sigmoid(
        speaker_embedding @ params["spk1_w"].T + params["spk1_b"]) * 2.0

    keys = keys + position_encoding(L, H, jnp.mean(speaker_key_weight, axis=-1), 0)
    query = query + position_encoding(T, H, jnp.mean(speaker_query_weight, axis=-1),
                                      current_mel_pos)

    # ---- tiling / padding (lane- and sublane-dense everywhere) --------------
    Hp = _round_up(H, 128)                       # lane-dense hidden dim
    tq = 256 if T >= 256 else _round_up(T, 16)   # bf16 sublane pack = 16
    Tp = _round_up(T, tq)
    tl = 512 if L >= 512 else _round_up(L, 128)  # lane width = 128
    Lp = _round_up(L, tl)
    n_t, n_l = Tp // tq, Lp // tl

    def pad_seq(x, s_to):   # (B, S, H) -> (B, Sp, Hp), bf16 for the MXU
        return jnp.pad(x, ((0, 0), (0, s_to - x.shape[1]), (0, Hp - H))
                       ).astype(jnp.bfloat16)

    def pad_w(w, scale=1.0):   # torch (out, in) -> (in, out), zero-padded (Hp, Hp)
        return jnp.pad(w.T * scale, ((0, Hp - H), (0, Hp - H))).astype(jnp.bfloat16)

    def pad_b(b):              # (H,) -> (1, Hp), kept f32
        return jnp.pad(b, (0, Hp - H))[None, :].astype(jnp.float32)

    inv_sqrt_len = 1.0 / math.sqrt(L)   # fold into Wo only (output_fc is affine)

    kernel = functools.partial(_attention_kernel, tl=tl, l_actual=L, l_padded=Lp)

    flops = 2 * B * (Tp * Hp * Hp            # query projection
                     + n_t * Lp * Hp * Hp    # key projection (per T tile)
                     + 2 * Tp * Lp * Hp      # scores + context
                     + Tp * Hp * Hp)         # output projection
    bytes_accessed = (2 * B * (Tp + 2 * Lp) * Hp    # q/k/v bf16
                      + 4 * B * Tp * Hp             # output f32
                      + 2 * 3 * Hp * Hp + 4 * 3 * Hp)

    grid_spec = pltpu.PrefetchScalarGridSpec(
        num_scalar_prefetch=0,
        grid=(B, n_t, n_l),
        in_specs=[
            pl.BlockSpec((None, tq, Hp), lambda b, ti, li: (b, ti, 0)),   # q
            pl.BlockSpec((None, tl, Hp), lambda b, ti, li: (b, li, 0)),   # k
            pl.BlockSpec((None, tl, Hp), lambda b, ti, li: (b, li, 0)),   # v
            pl.BlockSpec((Hp, Hp), lambda b, ti, li: (0, 0)),             # Wq (resident)
            pl.BlockSpec((1, Hp), lambda b, ti, li: (0, 0)),              # bq
            pl.BlockSpec((Hp, Hp), lambda b, ti, li: (0, 0)),             # Wk (resident)
            pl.BlockSpec((1, Hp), lambda b, ti, li: (0, 0)),              # bk
            pl.BlockSpec((Hp, Hp), lambda b, ti, li: (0, 0)),             # Wo (pre-scaled)
            pl.BlockSpec((1, Hp), lambda b, ti, li: (0, 0)),              # bo
        ],
        out_specs=pl.BlockSpec((None, tq, Hp), lambda b, ti, li: (b, ti, 0)),
        scratch_shapes=[
            pltpu.VMEM((tq, Hp), jnp.bfloat16),   # projected query
            pltpu.VMEM((tq, 1), jnp.float32),     # running max
            pltpu.VMEM((tq, 1), jnp.float32),     # running denominator
            pltpu.VMEM((tq, Hp), jnp.float32),    # context accumulator
        ],
    )

    out_p = pl.pallas_call(
        kernel,
        out_shape=jax.ShapeDtypeStruct((B, Tp, Hp), jnp.float32),
        grid_spec=grid_spec,
        compiler_params=pltpu.CompilerParams(
            dimension_semantics=("parallel", "parallel", "arbitrary"),
            vmem_limit_bytes=_vmem_limit_bytes()),
        cost_estimate=pl.CostEstimate(
            flops=int(flops),
            transcendentals=int(B * Tp * Lp),
            bytes_accessed=int(bytes_accessed)),
    )(pad_seq(query, Tp), pad_seq(keys, Lp), pad_seq(values, Lp),
      pad_w(params["wq"]), pad_b(params["bq"]),
      pad_w(params["wk"]), pad_b(params["bk"]),
      pad_w(params["wo"], scale=inv_sqrt_len), pad_b(params["bo"]))

    # TODO(synk): on v7x, fp8 storage for Wq/Wk/Wo would halve weight HBM
    # traffic for incremental decode; kept bf16 here for cross-generation use.
    return out_p[:, :T, :H]


# ------------------------------ parameters -----------------------------------
def init_params(key, speaker_embedding_dim, hidden_dim):
    ks = jax.random.split(key, 10)
    scale = 0.1
    # NOTE: the reference module also defines value_fc, but forward never
    # applies it to `values`, so it is intentionally omitted here.
    return {
        "spk0_w": scale * jax.random.normal(ks[0], (hidden_dim, speaker_embedding_dim), jnp.float32),
        "spk0_b": scale * jax.random.normal(ks[1], (hidden_dim,), jnp.float32),
        "spk1_w": scale * jax.random.normal(ks[2], (hidden_dim, speaker_embedding_dim), jnp.float32),
        "spk1_b": scale * jax.random.normal(ks[3], (hidden_dim,), jnp.float32),
        "wq": scale * jax.random.normal(ks[4], (hidden_dim, hidden_dim), jnp.float32),
        "bq": scale * jax.random.normal(ks[5], (hidden_dim,), jnp.float32),
        "wk": scale * jax.random.normal(ks[6], (hidden_dim, hidden_dim), jnp.float32),
        "bk": scale * jax.random.normal(ks[7], (hidden_dim,), jnp.float32),
        "wo": scale * jax.random.normal(ks[8], (hidden_dim, hidden_dim), jnp.float32),
        "bo": scale * jax.random.normal(ks[9], (hidden_dim,), jnp.float32),
    }


if __name__ == "__main__":
    B, T, L, H, S_EMB = 2, 8, 16, 32, 16   # batch, mel steps, text length, hidden, spk emb dim
    key = jax.random.PRNGKey(0)
    kq, kk, kv, ke, kp = jax.random.split(key, 5)

    query = jax.random.normal(kq, (B, T, H), jnp.float32)
    keys = jax.random.normal(kk, (B, L, H), jnp.float32)
    values = jax.random.normal(kv, (B, L, H), jnp.float32)
    speaker_embedding = jax.random.normal(ke, (B, S_EMB), jnp.float32)
    current_mel_pos = 3

    params = init_params(kp, S_EMB, H)

    fwd = jax.jit(attention_forward)
    out = fwd(query, keys, values, speaker_embedding, current_mel_pos, params)
    jax.block_until_ready(out)
    assert out.shape == (B, T, H) and out.dtype == jnp.float32
    assert bool(jnp.all(jnp.isfinite(out)))
    print("KERNEL_OK")
</pallas_src>

<mosaic_0001>
module attributes {stable_mosaic.version = 11 : i64} {
  func.func @_attention_kernel(%arg0: i32, %arg1: i32, %arg2: i32, %arg3: memref<1x16x128xbf16, #tpu.memory_space<vmem>>, %arg4: memref<1x128x128xbf16, #tpu.memory_space<vmem>>, %arg5: memref<1x128x128xbf16, #tpu.memory_space<vmem>>, %arg6: memref<128x128xbf16, #tpu.memory_space<vmem>>, %arg7: memref<1x128xf32, #tpu.memory_space<vmem>>, %arg8: memref<128x128xbf16, #tpu.memory_space<vmem>>, %arg9: memref<1x128xf32, #tpu.memory_space<vmem>>, %arg10: memref<128x128xbf16, #tpu.memory_space<vmem>>, %arg11: memref<1x128xf32, #tpu.memory_space<vmem>>, %arg12: memref<1x16x128xf32, #tpu.memory_space<vmem>>, %arg13: memref<16x128xbf16, #tpu.memory_space<vmem>>, %arg14: memref<16x1xf32, #tpu.memory_space<vmem>>, %arg15: memref<16x1xf32, #tpu.memory_space<vmem>>, %arg16: memref<16x128xf32, #tpu.memory_space<vmem>>) attributes {dimension_semantics = [#tpu.dimension_semantics<parallel>, #tpu.dimension_semantics<parallel>, #tpu.dimension_semantics<arbitrary>], iteration_bounds = array<i64: 2, 1, 1>, scalar_prefetch = 0 : i64, scratch_operands = 4 : i64, tpu.core_type = #tpu.core_type<tc>, window_params = [{transform_indices = @transform_0, window_bounds = array<i64: 1, 16, 128>}, {transform_indices = @transform_1, window_bounds = array<i64: 1, 128, 128>}, {transform_indices = @transform_2, window_bounds = array<i64: 1, 128, 128>}, {pipeline_mode = #tpu.pipeline_mode<synchronous>, transform_indices = @transform_3, window_bounds = array<i64: 128, 128>}, {pipeline_mode = #tpu.pipeline_mode<synchronous>, transform_indices = @transform_4, window_bounds = array<i64: 1, 128>}, {pipeline_mode = #tpu.pipeline_mode<synchronous>, transform_indices = @transform_5, window_bounds = array<i64: 128, 128>}, {pipeline_mode = #tpu.pipeline_mode<synchronous>, transform_indices = @transform_6, window_bounds = array<i64: 1, 128>}, {pipeline_mode = #tpu.pipeline_mode<synchronous>, transform_indices = @transform_7, window_bounds = array<i64: 128, 128>}, {pipeline_mode = #tpu.pipeline_mode<synchronous>, transform_indices = @transform_8, window_bounds = array<i64: 1, 128>}, {transform_indices = @transform_9, window_bounds = array<i64: 1, 16, 128>}]} {
    %c0_i32 = arith.constant 0 : i32
    %0 = arith.cmpi eq, %arg2, %c0_i32 : i32
    %1 = arith.extui %0 : i1 to i32
    %c0_i32_0 = arith.constant 0 : i32
    %2 = arith.cmpi ne, %1, %c0_i32_0 : i32
    scf.if %2 {
      %c0_33 = arith.constant 0 : index
      %c0_34 = arith.constant 0 : index
      %c0_35 = arith.constant 0 : index
      %50 = vector.load %arg3[%c0_33, %c0_34, %c0_35] : memref<1x16x128xbf16, #tpu.memory_space<vmem>>, vector<1x16x128xbf16>
      %51 = vector.shape_cast %50 : vector<1x16x128xbf16> to vector<16x128xbf16>
      %c0_36 = arith.constant 0 : index
      %c0_37 = arith.constant 0 : index
      %52 = vector.load %arg6[%c0_36, %c0_37] : memref<128x128xbf16, #tpu.memory_space<vmem>>, vector<128x128xbf16>
      %cst_38 = arith.constant dense<0.000000e+00> : vector<16x128xf32>
      %53 = tpu.matmul %51, %52, %cst_38 {dimension_numbers = #tpu.dot_dimension_numbers<[1], [0], [0], [1], [0, 0, 1, 1], [], []>} : vector<16x128xbf16>, vector<128x128xbf16>, vector<16x128xf32> -> vector<16x128xf32>
      %c0_39 = arith.constant 0 : index
      %c0_40 = arith.constant 0 : index
      %54 = vector.load %arg7[%c0_39, %c0_40] : memref<1x128xf32, #tpu.memory_space<vmem>>, vector<1x128xf32>
      %55 = vector.broadcast %54 : vector<1x128xf32> to vector<16x128xf32>
      %56 = arith.addf %53, %55 : vector<16x128xf32>
      %57 = arith.truncf %56 : vector<16x128xf32> to vector<16x128xbf16>
      %c0_41 = arith.constant 0 : index
      %c0_42 = arith.constant 0 : index
      %58 = vector.load %arg13[%c0_41, %c0_42] : memref<16x128xbf16, #tpu.memory_space<vmem>>, vector<16x128xbf16>
      tpu.vector_store %arg13[%c0_41, %c0_42], %57 {strides = array<i32>} : memref<16x128xbf16, #tpu.memory_space<vmem>>, vector<16x128xbf16>,
      %cst_43 = arith.constant -1.000000e+30 : f32
      %59 = vector.broadcast %cst_43 : f32 to vector<16x1xf32>
      %c0_44 = arith.constant 0 : index
      %c0_45 = arith.constant 0 : index
      %60 = vector.load %arg14[%c0_44, %c0_45] : memref<16x1xf32, #tpu.memory_space<vmem>>, vector<16x1xf32>
      tpu.vector_store %arg14[%c0_44, %c0_45], %59 {strides = array<i32>} : memref<16x1xf32, #tpu.memory_space<vmem>>, vector<16x1xf32>,
      %cst_46 = arith.constant 0.000000e+00 : f32
      %61 = vector.broadcast %cst_46 : f32 to vector<16x1xf32>
      %c0_47 = arith.constant 0 : index
      %c0_48 = arith.constant 0 : index
      %62 = vector.load %arg15[%c0_47, %c0_48] : memref<16x1xf32, #tpu.memory_space<vmem>>, vector<16x1xf32>
      tpu.vector_store %arg15[%c0_47, %c0_48], %61 {strides = array<i32>} : memref<16x1xf32, #tpu.memory_space<vmem>>, vector<16x1xf32>,
      %cst_49 = arith.constant 0.000000e+00 : f32
      %63 = vector.broadcast %cst_49 : f32 to vector<16x128xf32>
      %c0_50 = arith.constant 0 : index
      %c0_51 = arith.constant 0 : index
      %64 = vector.load %arg16[%c0_50, %c0_51] : memref<16x128xf32, #tpu.memory_space<vmem>>, vector<16x128xf32>
      tpu.vector_store %arg16[%c0_50, %c0_51], %63 {strides = array<i32>} : memref<16x128xf32, #tpu.memory_space<vmem>>, vector<16x128xf32>,
    } else {
    }
    %c0 = arith.constant 0 : index
    %c0_1 = arith.constant 0 : index
    %c0_2 = arith.constant 0 : index
    %3 = vector.load %arg4[%c0, %c0_1, %c0_2] : memref<1x128x128xbf16, #tpu.memory_space<vmem>>, vector<1x128x128xbf16>
    %4 = vector.shape_cast %3 : vector<1x128x128xbf16> to vector<128x128xbf16>
    %c0_3 = arith.constant 0 : index
    %c0_4 = arith.constant 0 : index
    %5 = vector.load %arg8[%c0_3, %c0_4] : memref<128x128xbf16, #tpu.memory_space<vmem>>, vector<128x128xbf16>
    %cst = arith.constant dense<0.000000e+00> : vector<128x128xf32>
    %6 = tpu.matmul %4, %5, %cst {dimension_numbers = #tpu.dot_dimension_numbers<[1], [0], [0], [1], [0, 0, 1, 1], [], []>} : vector<128x128xbf16>, vector<128x128xbf16>, vector<128x128xf32> -> vector<128x128xf32>
    %c0_5 = arith.constant 0 : index
    %c0_6 = arith.constant 0 : index
    %7 = vector.load %arg9[%c0_5, %c0_6] : memref<1x128xf32, #tpu.memory_space<vmem>>, vector<1x128xf32>
    %8 = vector.broadcast %7 : vector<1x128xf32> to vector<128x128xf32>
    %9 = arith.addf %6, %8 : vector<128x128xf32>
    %10 = arith.truncf %9 : vector<128x128xf32> to vector<128x128xbf16>
    %c0_7 = arith.constant 0 : index
    %c0_8 = arith.constant 0 : index
    %11 = vector.load %arg13[%c0_7, %c0_8] : memref<16x128xbf16, #tpu.memory_space<vmem>>, vector<16x128xbf16>
    %cst_9 = arith.constant dense<0.000000e+00> : vector<16x128xf32>
    %12 = tpu.matmul %11, %10, %cst_9 {dimension_numbers = #tpu.dot_dimension_numbers<[1], [1], [0], [0], [0, 0, 1, 0], [], []>} : vector<16x128xbf16>, vector<128x128xbf16>, vector<16x128xf32> -> vector<16x128xf32>
    %c128_i32 = arith.constant 128 : i32
    %13 = arith.muli %arg2, %c128_i32 : i32
    %14 = tpu.iota {dimensions = array<i32: 1>} : vector<16x128xi32>
    %15 = vector.broadcast %13 : i32 to vector<16x128xi32>
    %16 = arith.addi %15, %14 : vector<16x128xi32>
    %c16_i32 = arith.constant 16 : i32
    %17 = vector.broadcast %c16_i32 : i32 to vector<16x128xi32>
    %18 = arith.cmpi slt, %16, %17 : vector<16x128xi32>
    %cst_10 = arith.constant -1.000000e+30 : f32
    %19 = vector.broadcast %cst_10 : f32 to vector<16x128xf32>
    %20 = arith.select %18, %12, %19 : vector<16x128xi1>, vector<16x128xf32>
    %c0_11 = arith.constant 0 : index
    %c0_12 = arith.constant 0 : index
    %21 = vector.load %arg14[%c0_11, %c0_12] : memref<16x1xf32, #tpu.memory_space<vmem>>, vector<16x1xf32>
    %cst_13 = arith.constant dense<0xFF800000> : vector<16xf32>
    %22 = vector.multi_reduction <maximumf>, %20, %cst_13 [1] : vector<16x128xf32> to vector<16xf32>
    %23 = vector.shape_cast %22 : vector<16xf32> to vector<16x1xf32>
    %24 = arith.maximumf %21, %23 : vector<16x1xf32>
    %c0_14 = arith.constant 0 : index
    %c0_15 = arith.constant 0 : index
    %25 = vector.load %arg14[%c0_14, %c0_15] : memref<16x1xf32, #tpu.memory_space<vmem>>, vector<16x1xf32>
    %26 = arith.subf %25, %24 : vector<16x1xf32>
    %27 = math.exp %26 : vector<16x1xf32>
    %28 = vector.broadcast %24 : vector<16x1xf32> to vector<16x128xf32>
    %29 = arith.subf %20, %28 : vector<16x128xf32>
    %30 = math.exp %29 : vector<16x128xf32>
    %c0_16 = arith.constant 0 : index
    %c0_17 = arith.constant 0 : index
    %31 = vector.load %arg15[%c0_16, %c0_17] : memref<16x1xf32, #tpu.memory_space<vmem>>, vector<16x1xf32>
    %32 = arith.mulf %27, %31 : vector<16x1xf32>
    %cst_18 = arith.constant dense<0.000000e+00> : vector<16xf32>
    %33 = vector.multi_reduction <add>, %30, %cst_18 [1] : vector<16x128xf32> to vector<16xf32>
    %34 = vector.shape_cast %33 : vector<16xf32> to vector<16x1xf32>
    %35 = arith.addf %32, %34 : vector<16x1xf32>
    %c0_19 = arith.constant 0 : index
    %c0_20 = arith.constant 0 : index
    %36 = vector.load %arg15[%c0_19, %c0_20] : memref<16x1xf32, #tpu.memory_space<vmem>>, vector<16x1xf32>
    tpu.vector_store %arg15[%c0_19, %c0_20], %35 {strides = array<i32>} : memref<16x1xf32, #tpu.memory_space<vmem>>, vector<16x1xf32>,
    %c0_21 = arith.constant 0 : index
    %c0_22 = arith.constant 0 : index
    %37 = vector.load %arg16[%c0_21, %c0_22] : memref<16x128xf32, #tpu.memory_space<vmem>>, vector<16x128xf32>
    %38 = vector.broadcast %27 : vector<16x1xf32> to vector<16x128xf32>
    %39 = arith.mulf %38, %37 : vector<16x128xf32>
    %40 = arith.truncf %30 : vector<16x128xf32> to vector<16x128xbf16>
    %c0_23 = arith.constant 0 : index
    %c0_24 = arith.constant 0 : index
    %c0_25 = arith.constant 0 : index
    %41 = vector.load %arg5[%c0_23, %c0_24, %c0_25] : memref<1x128x128xbf16, #tpu.memory_space<vmem>>, vector<1x128x128xbf16>
    %42 = vector.shape_cast %41 : vector<1x128x128xbf16> to vector<128x128xbf16>
    %cst_26 = arith.constant dense<0.000000e+00> : vector<16x128xf32>
    %43 = tpu.matmul %40, %42, %cst_26 {dimension_numbers = #tpu.dot_dimension_numbers<[1], [0], [0], [1], [0, 0, 1, 1], [], []>} : vector<16x128xbf16>, vector<128x128xbf16>, vector<16x128xf32> -> vector<16x128xf32>
    %44 = arith.addf %39, %43 : vector<16x128xf32>
    %c0_27 = arith.constant 0 : index
    %c0_28 = arith.constant 0 : index
    %45 = vector.load %arg16[%c0_27, %c0_28] : memref<16x128xf32, #tpu.memory_space<vmem>>, vector<16x128xf32>
    tpu.vector_store %arg16[%c0_27, %c0_28], %44 {strides = array<i32>} : memref<16x128xf32, #tpu.memory_space<vmem>>, vector<16x128xf32>,
    %c0_29 = arith.constant 0 : index
    %c0_30 = arith.constant 0 : index
    %46 = vector.load %arg14[%c0_29, %c0_30] : memref<16x1xf32, #tpu.memory_space<vmem>>, vector<16x1xf32>
    tpu.vector_store %arg14[%c0_29, %c0_30], %24 {strides = array<i32>} : memref<16x1xf32, #tpu.memory_space<vmem>>, vector<16x1xf32>,
    %c0_i32_31 = arith.constant 0 : i32
    %47 = arith.cmpi eq, %arg2, %c0_i32_31 : i32
    %48 = arith.extui %47 : i1 to i32
    %c0_i32_32 = arith.constant 0 : i32
    %49 = arith.cmpi ne, %48, %c0_i32_32 : i32
    scf.if %49 {
      %c0_33 = arith.constant 0 : index
      %c0_34 = arith.constant 0 : index
      %50 = vector.load %arg16[%c0_33, %c0_34] : memref<16x128xf32, #tpu.memory_space<vmem>>, vector<16x128xf32>
      %c0_35 = arith.constant 0 : index
      %c0_36 = arith.constant 0 : index
      %51 = vector.load %arg15[%c0_35, %c0_36] : memref<16x1xf32, #tpu.memory_space<vmem>>, vector<16x1xf32>
      %52 = tpu.reciprocal %51 {approx = true} : vector<16x1xf32> -> vector<16x1xf32>
      %53 = vector.broadcast %52 : vector<16x1xf32> to vector<16x128xf32>
      %54 = arith.mulf %50, %53 : vector<16x128xf32>
      %55 = arith.truncf %54 : vector<16x128xf32> to vector<16x128xbf16>
      %c0_37 = arith.constant 0 : index
      %c0_38 = arith.constant 0 : index
      %56 = vector.load %arg10[%c0_37, %c0_38] : memref<128x128xbf16, #tpu.memory_space<vmem>>, vector<128x128xbf16>
      %cst_39 = arith.constant dense<0.000000e+00> : vector<16x128xf32>
      %57 = tpu.matmul %55, %56, %cst_39 {dimension_numbers = #tpu.dot_dimension_numbers<[1], [0], [0], [1], [0, 0, 1, 1], [], []>} : vector<16x128xbf16>, vector<128x128xbf16>, vector<16x128xf32> -> vector<16x128xf32>
      %c0_40 = arith.constant 0 : index
      %c0_41 = arith.constant 0 : index
      %58 = vector.load %arg11[%c0_40, %c0_41] : memref<1x128xf32, #tpu.memory_space<vmem>>, vector<1x128xf32>
      %59 = vector.broadcast %58 : vector<1x128xf32> to vector<16x128xf32>
      %60 = arith.addf %57, %59 : vector<16x128xf32>
      %c0_42 = arith.constant 0 : index
      %c0_43 = arith.constant 0 : index
      %c0_44 = arith.constant 0 : index
      %61 = vector.load %arg12[%c0_42, %c0_43, %c0_44] : memref<1x16x128xf32, #tpu.memory_space<vmem>>, vector<1x16x128xf32>
      %62 = vector.shape_cast %61 : vector<1x16x128xf32> to vector<16x128xf32>
      %63 = vector.shape_cast %60 : vector<16x128xf32> to vector<1x16x128xf32>
      tpu.vector_store %arg12[%c0_42, %c0_43, %c0_44], %63 {strides = array<i32>} : memref<1x16x128xf32, #tpu.memory_space<vmem>>, vector<1x16x128xf32>,
    } else {
    }
    return
  }
  func.func @transform_0(%arg0: i32, %arg1: i32, %arg2: i32) -> (i32, i32, i32) {
    %c0_i32 = arith.constant 0 : i32
    %c0_i32_0 = arith.constant 0 : i32
    return %arg0, %arg1, %c0_i32 : i32, i32, i32
  }
  func.func @transform_1(%arg0: i32, %arg1: i32, %arg2: i32) -> (i32, i32, i32) {
    %c0_i32 = arith.constant 0 : i32
    %c0_i32_0 = arith.constant 0 : i32
    return %arg0, %arg2, %c0_i32 : i32, i32, i32
  }
  func.func @transform_2(%arg0: i32, %arg1: i32, %arg2: i32) -> (i32, i32, i32) {
    %c0_i32 = arith.constant 0 : i32
    %c0_i32_0 = arith.constant 0 : i32
    return %arg0, %arg2, %c0_i32 : i32, i32, i32
  }
  func.func @transform_3(%arg0: i32, %arg1: i32, %arg2: i32) -> (i32, i32) {
    %c0_i32 = arith.constant 0 : i32
    %c0_i32_0 = arith.constant 0 : i32
    %c0_i32_1 = arith.constant 0 : i32
    return %c0_i32, %c0_i32_0 : i32, i32
  }
  func.func @transform_4(%arg0: i32, %arg1: i32, %arg2: i32) -> (i32, i32) {
    %c0_i32 = arith.constant 0 : i32
    %c0_i32_0 = arith.constant 0 : i32
    %c0_i32_1 = arith.constant 0 : i32
    return %c0_i32, %c0_i32_0 : i32, i32
  }
  func.func @transform_5(%arg0: i32, %arg1: i32, %arg2: i32) -> (i32, i32) {
    %c0_i32 = arith.constant 0 : i32
    %c0_i32_0 = arith.constant 0 : i32
    %c0_i32_1 = arith.constant 0 : i32
    return %c0_i32, %c0_i32_0 : i32, i32
  }
  func.func @transform_6(%arg0: i32, %arg1: i32, %arg2: i32) -> (i32, i32) {
    %c0_i32 = arith.constant 0 : i32
    %c0_i32_0 = arith.constant 0 : i32
    %c0_i32_1 = arith.constant 0 : i32
    return %c0_i32, %c0_i32_0 : i32, i32
  }
  func.func @transform_7(%arg0: i32, %arg1: i32, %arg2: i32) -> (i32, i32) {
    %c0_i32 = arith.constant 0 : i32
    %c0_i32_0 = arith.constant 0 : i32
    %c0_i32_1 = arith.constant 0 : i32
    return %c0_i32, %c0_i32_0 : i32, i32
  }
  func.func @transform_8(%arg0: i32, %arg1: i32, %arg2: i32) -> (i32, i32) {
    %c0_i32 = arith.constant 0 : i32
    %c0_i32_0 = arith.constant 0 : i32
    %c0_i32_1 = arith.constant 0 : i32
    return %c0_i32, %c0_i32_0 : i32, i32
  }
  func.func @transform_9(%arg0: i32, %arg1: i32, %arg2: i32) -> (i32, i32, i32) {
    %c0_i32 = arith.constant 0 : i32
    %c0_i32_0 = arith.constant 0 : i32
    return %arg0, %arg1, %c0_i32 : i32, i32, i32
  }
}

</mosaic_0001>

<llo_original>
// kernel: attention_forward.1
$region0: #{attention_forward.1}
  #allocation0 [shape = 'u32[]', space=smem, size = 0x4, offset = 0x4, fixed_abs, tag = 'smem constant byte address 0x4 - core index']
  #allocation1 [shape = 'u32[144,128]{1,0:T(1,128)}', space=vmem, size = 0x12000, scoped, tag = 'internal scratch']
  #allocation2 [shape = 'bf16[16,128]{1,0:T(16,128)(2,1)}', space=vmem, size = 0x1000, scoped, tag = 'scratch operand']
  #allocation3 [shape = 'f32[16,1]{1,0:T(8,128)}', space=vmem, size = 0x2000, scoped, tag = 'scratch operand']
  #allocation4 [shape = 'f32[16,1]{1,0:T(8,128)}', space=vmem, size = 0x2000, scoped, tag = 'scratch operand']
  #allocation5 [shape = 'f32[16,128]{1,0:T(8,128)}', space=vmem, size = 0x2000, scoped, tag = 'scratch operand']
  %s0 = inlined_call_operand.vmem [shape: bf16[2,16,128], index: 0, kind: input, shape index: {}]
  %s1 = inlined_call_operand.vmem [shape: bf16[2,128,128], index: 1, kind: input, shape index: {}]
  %s2 = inlined_call_operand.vmem [shape: bf16[2,128,128], index: 2, kind: input, shape index: {}]
  %s3 = inlined_call_operand.vmem [shape: bf16[128,128], index: 3, kind: input, shape index: {}]
  %s4 = inlined_call_operand.vmem [shape: f32[1,128], index: 4, kind: input, shape index: {}]
  %s5 = inlined_call_operand.vmem [shape: bf16[128,128], index: 5, kind: input, shape index: {}]
  %s6 = inlined_call_operand.vmem [shape: f32[1,128], index: 6, kind: input, shape index: {}]
  %s7 = inlined_call_operand.vmem [shape: bf16[128,128], index: 7, kind: input, shape index: {}]
  %s8 = inlined_call_operand.vmem [shape: f32[1,128], index: 8, kind: input, shape index: {}]
  %s9 = inlined_call_operand.vmem [shape: f32[2,16,128], index: 9, kind: output, shape index: {}]
  %s10 = sld [smem:[#allocation0]]
  $region77: #{attention_forward.1} parent=0
    _
  %s12 = ssub.s32 1, %s10
  %s13 = scalar_select 0, %s12, %s10
  loop: start=0, step=1, limit=4
  $region2: #{attention_forward.1} parent=0 // loop_pre_header
    _
  $region3: #{attention_forward.1} parent=0 // loop_header
    %s15 = sphi 0, %s19
    %p16 = scmp.ge.s32.totalorder %s15, 4
    %s22 = sphi 0, %s41
    %s23 = sphi 0, %s37
    %s24 = sphi 0, %s33
    %s25 = sphi 0, %s22
    %s26 = sphi 0, %s23
    %s27 = sphi 0, %s24
    %s28 = sphi 0, %s25
    %s29 = sphi 0, %s26
    %s30 = sphi 0, %s27
    %s46 = sphi 0, %s48
    %s49 = sphi 0, %s46
    %s50 = sphi 0, %s49
    %s66 = sphi 0, %s50
    %s74 = sphi 0, %s76
    %s77 = sphi 0, %s74
    %s78 = sphi 0, %s77
    %s94 = sphi 0, %s78
    %s102 = sphi 0, %s104
    %s105 = sphi 0, %s102
    %s106 = sphi 0, %s105
    %s122 = sphi 0, %s106
    %s126 = sphi 0, %s126
    %s128 = sphi 0, %s126
    %s129 = sphi 0, %s128
    %s143 = sphi 0, %s129
    %s147 = sphi 0, %s147
    %s149 = sphi 0, %s147
    %s150 = sphi 0, %s149
    %s164 = sphi 0, %s150
    %s168 = sphi 0, %s168
    %s170 = sphi 0, %s168
    %s171 = sphi 0, %s170
    %s185 = sphi 0, %s171
    %s189 = sphi 0, %s189
    %s191 = sphi 0, %s189
    %s192 = sphi 0, %s191
    %s206 = sphi 0, %s192
    %s210 = sphi 0, %s210
    %s212 = sphi 0, %s210
    %s213 = sphi 0, %s212
    %s227 = sphi 0, %s213
    %s231 = sphi 0, %s231
    %s233 = sphi 0, %s231
    %s234 = sphi 0, %s233
    %s248 = sphi 0, %s234
    %s256 = sphi 0, %s258
    %s259 = sphi 0, %s256
    %s260 = sphi 0, %s259
    %s276 = sphi 0, %s260
  $region4: #{attention_forward.1} parent=0 // loop_header_branch
    %18 = sbr.rel (%p16) target = $region8
  $region5: #{attention_forward.1} parent=0 // loop_body
    %s20 = ssub.s32 %s15, 1
    %s21 = ssub.s32 %s15, 2
    %s31 = sadd.s32 1, %s24
    %p32 = scmp.ge.s32.totalorder %s31, 1
    %s33 = scalar_select %p32, 0, %s31
    %s34 = sadd.s32 1, %s23
    %s35 = scalar_select %p32, %s34, %s23
    %p36 = scmp.ge.s32.totalorder %s35, 1
    %s37 = scalar_select %p36, 0, %s35
    %s38 = sadd.s32 1, %s22
    %s39 = scalar_select %p36, %s38, %s22
    %p40 = scmp.ge.s32.totalorder %s39, 2
    %s41 = scalar_select %p40, 0, %s39
    %s42 = ssub.s32 %s22, %s41
    %s43 = ssub.s32 %s23, %s37
    %s44 = sor.u32 %s42, %s43
    %p45 = scmp.eq.s32.totalorder %s44, 0
    %s47 = sadd.s32 %s46, 1
    %s48 = scalar_select %p45, %s46, %s47
    %p51 = pneg %p45
    %p52 = scmp.eq.s32.totalorder %s15, 1
    %p53 = por %p51, %p52
    %p54 = scmp.ne.s32.totalorder %s46, %s49
    %p55 = scmp.eq.s32.totalorder %s15, 0
    %p56 = por %p54, %p55
    %p57 = scmp.ne.s32.totalorder %s46, %s49
    %p58 = scmp.eq.s32.totalorder %s20, 1
    %p59 = por %p57, %p58
    %p60 = scmp.ne.s32.totalorder %s49, %s50
    %p61 = scmp.eq.s32.totalorder %s20, 0
    %p62 = por %p60, %p61
    %p63 = scmp.ne.s32.totalorder %s49, %s50
    %p64 = scmp.eq.s32.totalorder %s21, 1
    %p65 = por %p63, %p64
    %p67 = scmp.ne.s32.totalorder %s50, %s66
    %p68 = scmp.eq.s32.totalorder %s21, 0
    %p69 = por %p67, %p68
    %s70 = ssub.s32 %s22, %s41
    %s71 = ssub.s32 %s24, %s33
    %s72 = sor.u32 %s70, %s71
    %p73 = scmp.eq.s32.totalorder %s72, 0
    %s75 = sadd.s32 %s74, 1
    %s76 = scalar_select %p73, %s74, %s75
    %p79 = pneg %p73
    %p80 = scmp.eq.s32.totalorder %s15, 1
    %p81 = por %p79, %p80
    %p82 = scmp.ne.s32.totalorder %s74, %s77
    %p83 = scmp.eq.s32.totalorder %s15, 0
    %p84 = por %p82, %p83
    %p85 = scmp.ne.s32.totalorder %s74, %s77
    %p86 = scmp.eq.s32.totalorder %s20, 1
    %p87 = por %p85, %p86
    %p88 = scmp.ne.s32.totalorder %s77, %s78
    %p89 = scmp.eq.s32.totalorder %s20, 0
    %p90 = por %p88, %p89
    %p91 = scmp.ne.s32.totalorder %s77, %s78
    %p92 = scmp.eq.s32.totalorder %s21, 1
    %p93 = por %p91, %p92
    %p95 = scmp.ne.s32.totalorder %s78, %s94
    %p96 = scmp.eq.s32.totalorder %s21, 0
    %p97 = por %p95, %p96
    %s98 = ssub.s32 %s22, %s41
    %s99 = ssub.s32 %s24, %s33
    %s100 = sor.u32 %s98, %s99
    %p101 = scmp.eq.s32.totalorder %s100, 0
    %s103 = sadd.s32 %s102, 1
    %s104 = scalar_select %p101, %s102, %s103
    %p107 = pneg %p101
    %p108 = scmp.eq.s32.totalorder %s15, 1
    %p109 = por %p107, %p108
    %p110 = scmp.ne.s32.totalorder %s102, %s105
    %p111 = scmp.eq.s32.totalorder %s15, 0
    %p112 = por %p110, %p111
    %p113 = scmp.ne.s32.totalorder %s102, %s105
    %p114 = scmp.eq.s32.totalorder %s20, 1
    %p115 = por %p113, %p114
    %p116 = scmp.ne.s32.totalorder %s105, %s106
    %p117 = scmp.eq.s32.totalorder %s20, 0
    %p118 = por %p116, %p117
    %p119 = scmp.ne.s32.totalorder %s105, %s106
    %p120 = scmp.eq.s32.totalorder %s21, 1
    %p121 = por %p119, %p120
    %p123 = scmp.ne.s32.totalorder %s106, %s122
    %p124 = scmp.eq.s32.totalorder %s21, 0
    %p125 = por %p123, %p124
    %s127 = sadd.s32 %s126, 1
    %p130 = scmp.eq.s32.totalorder %s15, 1
    %p131 = scmp.ne.s32.totalorder %s126, %s128
    %p132 = scmp.eq.s32.totalorder %s15, 0
    %p133 = por %p131, %p132
    %p134 = scmp.ne.s32.totalorder %s126, %s128
    %p135 = scmp.eq.s32.totalorder %s20, 1
    %p136 = por %p134, %p135
    %p137 = scmp.ne.s32.totalorder %s128, %s129
    %p138 = scmp.eq.s32.totalorder %s20, 0
    %p139 = por %p137, %p138
    %p140 = scmp.ne.s32.totalorder %s128, %s129
    %p141 = scmp.eq.s32.totalorder %s21, 1
    %p142 = por %p140, %p141
    %p144 = scmp.ne.s32.totalorder %s129, %s143
    %p145 = scmp.eq.s32.totalorder %s21, 0
    %p146 = por %p144, %p145
    %s148 = sadd.s32 %s147, 1
    %p151 = scmp.eq.s32.totalorder %s15, 1
    %p152 = scmp.ne.s32.totalorder %s147, %s149
    %p153 = scmp.eq.s32.totalorder %s15, 0
    %p154 = por %p152, %p153
    %p155 = scmp.ne.s32.totalorder %s147, %s149
    %p156 = scmp.eq.s32.totalorder %s20, 1
    %p157 = por %p155, %p156
    %p158 = scmp.ne.s32.totalorder %s149, %s150
    %p159 = scmp.eq.s32.totalorder %s20, 0
    %p160 = por %p158, %p159
    %p161 = scmp.ne.s32.totalorder %s149, %s150
    %p162 = scmp.eq.s32.totalorder %s21, 1
    %p163 = por %p161, %p162
    %p165 = scmp.ne.s32.totalorder %s150, %s164
    %p166 = scmp.eq.s32.totalorder %s21, 0
    %p167 = por %p165, %p166
    %s169 = sadd.s32 %s168, 1
    %p172 = scmp.eq.s32.totalorder %s15, 1
    %p173 = scmp.ne.s32.totalorder %s168, %s170
    %p174 = scmp.eq.s32.totalorder %s15, 0
    %p175 = por %p173, %p174
    %p176 = scmp.ne.s32.totalorder %s168, %s170
    %p177 = scmp.eq.s32.totalorder %s20, 1
    %p178 = por %p176, %p177
    %p179 = scmp.ne.s32.totalorder %s170, %s171
    %p180 = scmp.eq.s32.totalorder %s20, 0
    %p181 = por %p179, %p180
    %p182 = scmp.ne.s32.totalorder %s170, %s171
    %p183 = scmp.eq.s32.totalorder %s21, 1
    %p184 = por %p182, %p183
    %p186 = scmp.ne.s32.totalorder %s171, %s185
    %p187 = scmp.eq.s32.totalorder %s21, 0
    %p188 = por %p186, %p187
    %s190 = sadd.s32 %s189, 1
    %p193 = scmp.eq.s32.totalorder %s15, 1
    %p194 = scmp.ne.s32.totalorder %s189, %s191
    %p195 = scmp.eq.s32.totalorder %s15, 0
    %p196 = por %p194, %p195
    %p197 = scmp.ne.s32.totalorder %s189, %s191
    %p198 = scmp.eq.s32.totalorder %s20, 1
    %p199 = por %p197, %p198
    %p200 = scmp.ne.s32.totalorder %s191, %s192
    %p201 = scmp.eq.s32.totalorder %s20, 0
    %p202 = por %p200, %p201
    %p203 = scmp.ne.s32.totalorder %s191, %s192
    %p204 = scmp.eq.s32.totalorder %s21, 1
    %p205 = por %p203, %p204
    %p207 = scmp.ne.s32.totalorder %s192, %s206
    %p208 = scmp.eq.s32.totalorder %s21, 0
    %p209 = por %p207, %p208
    %s211 = sadd.s32 %s210, 1
    %p214 = scmp.eq.s32.totalorder %s15, 1
    %p215 = scmp.ne.s32.totalorder %s210, %s212
    %p216 = scmp.eq.s32.totalorder %s15, 0
    %p217 = por %p215, %p216
    %p218 = scmp.ne.s32.totalorder %s210, %s212
    %p219 = scmp.eq.s32.totalorder %s20, 1
    %p220 = por %p218, %p219
    %p221 = scmp.ne.s32.totalorder %s212, %s213
    %p222 = scmp.eq.s32.totalorder %s20, 0
    %p223 = por %p221, %p222
    %p224 = scmp.ne.s32.totalorder %s212, %s213
    %p225 = scmp.eq.s32.totalorder %s21, 1
    %p226 = por %p224, %p225
    %p228 = scmp.ne.s32.totalorder %s213, %s227
    %p229 = scmp.eq.s32.totalorder %s21, 0
    %p230 = por %p228, %p229
    %s232 = sadd.s32 %s231, 1
    %p235 = scmp.eq.s32.totalorder %s15, 1
    %p236 = scmp.ne.s32.totalorder %s231, %s233
    %p237 = scmp.eq.s32.totalorder %s15, 0
    %p238 = por %p236, %p237
    %p239 = scmp.ne.s32.totalorder %s231, %s233
    %p240 = scmp.eq.s32.totalorder %s20, 1
    %p241 = por %p239, %p240
    %p242 = scmp.ne.s32.totalorder %s233, %s234
    %p243 = scmp.eq.s32.totalorder %s20, 0
    %p244 = por %p242, %p243
    %p245 = scmp.ne.s32.totalorder %s233, %s234
    %p246 = scmp.eq.s32.totalorder %s21, 1
    %p247 = por %p245, %p246
    %p249 = scmp.ne.s32.totalorder %s234, %s248
    %p250 = scmp.eq.s32.totalorder %s21, 0
    %p251 = por %p249, %p250
    %s252 = ssub.s32 %s22, %s41
    %s253 = ssub.s32 %s23, %s37
    %s254 = sor.u32 %s252, %s253
    %p255 = scmp.eq.s32.totalorder %s254, 0
    %s257 = sadd.s32 %s256, 1
    %s258 = scalar_select %p255, %s256, %s257
    %p261 = pneg %p255
    %p262 = scmp.eq.s32.totalorder %s15, 1
    %p263 = por %p261, %p262
    %p264 = scmp.ne.s32.totalorder %s256, %s259
    %p265 = scmp.eq.s32.totalorder %s15, 0
    %p266 = por %p264, %p265
    %p267 = scmp.ne.s32.totalorder %s256, %s259
    %p268 = scmp.eq.s32.totalorder %s20, 1
    %p269 = por %p267, %p268
    %p270 = scmp.ne.s32.totalorder %s259, %s260
    %p271 = scmp.eq.s32.totalorder %s20, 0
    %p272 = por %p270, %p271
    %p273 = scmp.ne.s32.totalorder %s259, %s260
    %p274 = scmp.eq.s32.totalorder %s21, 1
    %p275 = por %p273, %p274
    %p277 = scmp.ne.s32.totalorder %s260, %s276
    %p278 = scmp.eq.s32.totalorder %s21, 0
    %p279 = por %p277, %p278
    %p280 = scmp.le.s32.totalorder 1, %s15
    %p281 = scmp.lt.s32.totalorder %s15, 3
    %p282 = pnand %p280, %p281
    %p283 = pneg %p282
    // Predicated region
    $region9: #{attention_forward.1} parent=5 // pred_check
      _
    $region10: #{attention_forward.1} parent=5 // pred_check_branch
      %285 = sbr.rel (%p282) target = $region12
    $region11: #{attention_forward.1} parent=5 // pred_region
      %s286 = ssub.s32 %s15, 1
      // Predicated region
      $region13: #{attention_forward.1} parent=11 // pred_check
        %p287 = pneg %p139
      $region14: #{attention_forward.1} parent=11 // pred_check_branch
        %289 = sbr.rel (%p287) target = $region16
      $region15: #{attention_forward.1} parent=11 // pred_region
        _
      $region16: #{attention_forward.1} parent=11 // pred_fallthru
        _
      // Predicated region
      $region17: #{attention_forward.1} parent=11 // pred_check
        %p290 = pneg %p160
      $region18: #{attention_forward.1} parent=11 // pred_check_branch
        %292 = sbr.rel (%p290) target = $region20
      $region19: #{attention_forward.1} parent=11 // pred_region
        _
      $region20: #{attention_forward.1} parent=11 // pred_fallthru
        _
      // Predicated region
      $region21: #{attention_forward.1} parent=11 // pred_check
        %p293 = pneg %p181
      $region22: #{attention_forward.1} parent=11 // pred_check_branch
        %295 = sbr.rel (%p293) target = $region24
      $region23: #{attention_forward.1} parent=11 // pred_region
        _
      $region24: #{attention_forward.1} parent=11 // pred_fallthru
        _
      // Predicated region
      $region25: #{attention_forward.1} parent=11 // pred_check
        %p296 = pneg %p202
      $region26: #{attention_forward.1} parent=11 // pred_check_branch
        %298 = sbr.rel (%p296) target = $region28
      $region27: #{attention_forward.1} parent=11 // pred_region
        _
      $region28: #{attention_forward.1} parent=11 // pred_fallthru
        _
      // Predicated region
      $region29: #{attention_forward.1} parent=11 // pred_check
        %p299 = pneg %p223
      $region30: #{attention_forward.1} parent=11 // pred_check_branch
        %301 = sbr.rel (%p299) target = $region32
      $region31: #{attention_forward.1} parent=11 // pred_region
        _
      $region32: #{attention_forward.1} parent=11 // pred_fallthru
        _
      // Predicated region
      $region33: #{attention_forward.1} parent=11 // pred_check
        %p302 = pneg %p244
      $region34: #{attention_forward.1} parent=11 // pred_check_branch
        %304 = sbr.rel (%p302) target = $region36
      $region35: #{attention_forward.1} parent=11 // pred_region
        _
      $region36: #{attention_forward.1} parent=11 // pred_fallthru
        _
    $region12: #{attention_forward.1} parent=5 // pred_fallthru
      _
    %p305 = scmp.lt.s32.totalorder %s15, 2
    // Predicated region
    $region37: #{attention_forward.1} parent=5 // pred_check
      %p306 = pneg %p305
    $region38: #{attention_forward.1} parent=5 // pred_check_branch
      %308 = sbr.rel (%p306) target = $region40
    $region39: #{attention_forward.1} parent=5 // pred_region
      // Predicated region
      $region41: #{attention_forward.1} parent=39 // pred_check
        %p309 = pneg %p56
      $region42: #{attention_forward.1} parent=39 // pred_check_branch
        %311 = sbr.rel (%p309) target = $region44
      $region43: #{attention_forward.1} parent=39 // pred_region
        %s312 = smul.u32 2, %s23
        %p313 = scmp.lt.s32.totalorder %s22, 1
        %s314 = scalar_select %p313, %s22, 1
        %p315 = scmp.lt.s32.totalorder %s312, 1
        %s316 = scalar_select %p315, %s312, 1
        %s317 = smul.addr %s314, 2
        %s318 = sadd.s32 %s316, %s317
        %s319 = smul.addr %s318, 4
        %s320 = scalar_lea.vmem %s0, %s319
        %s321 = smul.u32 2, %s23
      $region44: #{attention_forward.1} parent=39 // pred_fallthru
        _
      // Predicated region
      $region45: #{attention_forward.1} parent=39 // pred_check
        %p322 = pneg %p84
      $region46: #{attention_forward.1} parent=39 // pred_check_branch
        %324 = sbr.rel (%p322) target = $region48
      $region47: #{attention_forward.1} parent=39 // pred_region
        %s325 = smul.u32 16, %s24
        %p326 = scmp.lt.s32.totalorder %s22, 1
        %s327 = scalar_select %p326, %s22, 1
        %p328 = scmp.lt.s32.totalorder %s325, 15
        %s329 = scalar_select %p328, %s325, 15
        %s330 = smul.addr %s327, 16
        %s331 = sadd.s32 %s329, %s330
        %s332 = smul.addr %s331, 4
        %s333 = scalar_lea.vmem %s1, %s332
        %s334 = smul.u32 16, %s24
      $region48: #{attention_forward.1} parent=39 // pred_fallthru
        _
      // Predicated region
      $region49: #{attention_forward.1} parent=39 // pred_check
        %p335 = pneg %p112
      $region50: #{attention_forward.1} parent=39 // pred_check_branch
        %337 = sbr.rel (%p335) target = $region52
      $region51: #{attention_forward.1} parent=39 // pred_region
        %s338 = smul.u32 16, %s24
        %p339 = scmp.lt.s32.totalorder %s22, 1
        %s340 = scalar_select %p339, %s22, 1
        %p341 = scmp.lt.s32.totalorder %s338, 15
        %s342 = scalar_select %p341, %s338, 15
        %s343 = smul.addr %s340, 16
        %s344 = sadd.s32 %s342, %s343
        %s345 = smul.addr %s344, 4
        %s346 = scalar_lea.vmem %s2, %s345
        %s347 = smul.u32 16, %s24
      $region52: #{attention_forward.1} parent=39 // pred_fallthru
        _
    $region40: #{attention_forward.1} parent=5 // pred_fallthru
      _
    %p348 = scmp.le.s32.totalorder 1, %s15
    %p349 = scmp.lt.s32.totalorder %s15, 3
    %p350 = pnand %p348, %p349
    %p351 = pneg %p350
    // Predicated region
    $region53: #{attention_forward.1} parent=5 // pred_check
      _
    $region54: #{attention_forward.1} parent=5 // pred_check_branch
      %353 = sbr.rel (%p350) target = $region56
    $region55: #{attention_forward.1} parent=5 // pred_region
      %s354 = ssub.s32 %s15, 1
      %s355 = smul.u32 2, %s26
      %p356 = scmp.lt.s32.totalorder %s25, 1
      %s357 = scalar_select %p356, %s25, 1
      %p358 = scmp.lt.s32.totalorder %s355, 1
      %s359 = scalar_select %p358, %s355, 1
      %s360 = smul.addr %s357, 2
      %s361 = sadd.s32 %s359, %s360
      %s362 = smul.addr %s361, 4
      %s363 = scalar_lea.vmem %s0, %s362
      %p364 = pneg %p62
      %p365 = pneg %p59
      %s366 = smul.u32 16, %s27
      %p367 = scmp.lt.s32.totalorder %s25, 1
      %s368 = scalar_select %p367, %s25, 1
      %p369 = scmp.lt.s32.totalorder %s366, 15
      %s370 = scalar_select %p369, %s366, 15
      %s371 = smul.addr %s368, 16
      %s372 = sadd.s32 %s370, %s371
      %s373 = smul.addr %s372, 4
      %s374 = scalar_lea.vmem %s1, %s373
      %p375 = pneg %p90
      %p376 = pneg %p87
      %s377 = smul.u32 16, %s27
      %p378 = scmp.lt.s32.totalorder %s25, 1
      %s379 = scalar_select %p378, %s25, 1
      %p380 = scmp.lt.s32.totalorder %s377, 15
      %s381 = scalar_select %p380, %s377, 15
      %s382 = smul.addr %s379, 16
      %s383 = sadd.s32 %s381, %s382
      %s384 = smul.addr %s383, 4
      %s385 = scalar_lea.vmem %s2, %s384
      %p386 = pneg %p118
      %p387 = pneg %p115
      %p388 = pneg %p139
      %p389 = pneg %p136
      %p390 = pneg %p160
      %p391 = pneg %p157
      %p392 = pneg %p181
      %p393 = pneg %p178
      %p394 = pneg %p202
      %p395 = pneg %p199
      %p396 = pneg %p223
      %p397 = pneg %p220
      %p398 = pneg %p244
      %p399 = pneg %p241
      %p400 = pneg %p272
      %p401 = pneg %p269
      %s402 = smul.u32 2, %s26
      %p403 = scmp.lt.s32.totalorder %s25, 1
      %s404 = scalar_select %p403, %s25, 1
      %p405 = scmp.lt.s32.totalorder %s402, 1
      %s406 = scalar_select %p405, %s402, 1
      %s407 = smul.addr %s404, 2
      %s408 = sadd.s32 %s406, %s407
      %s409 = smul.addr %s408, 8
      %s410 = scalar_lea.vmem %s9, %s409
      %s411 = smul.u32 2, %s26
      %p412 = scmp.lt.s32.totalorder %s25, 1
      %s413 = scalar_select %p412, %s25, 1
      %p414 = scmp.lt.s32.totalorder %s411, 1
      %s415 = scalar_select %p414, %s411, 1
      %s416 = smul.addr %s413, 2
      %s417 = sadd.s32 %s415, %s416
      %s418 = smul.addr %s417, 4
      %s419 = scalar_lea.vmem %s0, %s418
      %s420 = smul.u32 2, %s26
      %s421 = smul.u32 16, %s27
      %p422 = scmp.lt.s32.totalorder %s25, 1
      %s423 = scalar_select %p422, %s25, 1
      %p424 = scmp.lt.s32.totalorder %s421, 15
      %s425 = scalar_select %p424, %s421, 15
      %s426 = smul.addr %s423, 16
      %s427 = sadd.s32 %s425, %s426
      %s428 = smul.addr %s427, 4
      %s429 = scalar_lea.vmem %s1, %s428
      %s430 = smul.u32 16, %s27
      %s431 = smul.u32 16, %s27
      %p432 = scmp.lt.s32.totalorder %s25, 1
      %s433 = scalar_select %p432, %s25, 1
      %p434 = scmp.lt.s32.totalorder %s431, 15
      %s435 = scalar_select %p434, %s431, 15
      %s436 = smul.addr %s433, 16
      %s437 = sadd.s32 %s435, %s436
      %s438 = smul.addr %s437, 4
      %s439 = scalar_lea.vmem %s2, %s438
      %s440 = smul.u32 16, %s27
      %s441 = smul.u32 2, %s26
      %p442 = scmp.lt.s32.totalorder %s25, 1
      %s443 = scalar_select %p442, %s25, 1
      %p444 = scmp.lt.s32.totalorder %s441, 1
      %s445 = scalar_select %p444, %s441, 1
      %s446 = smul.addr %s443, 2
      %s447 = sadd.s32 %s445, %s446
      %s448 = smul.addr %s447, 8
      %s449 = scalar_lea.vmem %s9, %s448
      %s450 = smul.u32 2, %s26
      %p452 = scmp.eq.s32.totalorder %s27, 0
      // Predicated region
      $region57: #{attention_forward.1} parent=55 // pred_check
        %p453 = pneg %p452
      $region58: #{attention_forward.1} parent=55 // pred_check_branch
        %455 = sbr.rel (%p453) target = $region60
      $region59: #{attention_forward.1} parent=55 // pred_region
        %v456 = vld [vmem:[%s419] sm:$0xf]
        %v457 = vld [vmem:[%s419 + $0x4] sm:$0xf]
        %v458 = vld [vmem:[%s3] sm:$0xf]
        %v459 = vld [vmem:[%s3 + $0x4] sm:$0xf]
        %v460 = vld [vmem:[%s3 + $0x8] sm:$0xf]
        %v461 = vld [vmem:[%s3 + $0xc] sm:$0xf]
        %v462 = vld [vmem:[%s3 + $0x10] sm:$0xf]
        %v463 = vld [vmem:[%s3 + $0x14] sm:$0xf]
        %v464 = vld [vmem:[%s3 + $0x18] sm:$0xf]
        %v465 = vld [vmem:[%s3 + $0x1c] sm:$0xf]
        %v466 = vld [vmem:[%s3 + $0x20] sm:$0xf]
        %v467 = vld [vmem:[%s3 + $0x24] sm:$0xf]
        %v468 = vld [vmem:[%s3 + $0x28] sm:$0xf]
        %v469 = vld [vmem:[%s3 + $0x2c] sm:$0xf]
        %v470 = vld [vmem:[%s3 + $0x30] sm:$0xf]
        %v471 = vld [vmem:[%s3 + $0x34] sm:$0xf]
        %v472 = vld [vmem:[%s3 + $0x38] sm:$0xf]
        %v473 = vld [vmem:[%s3 + $0x3c] sm:$0xf]
        %v474 = vld [vmem:[%s4] sm:$0x1]
        %v476 = vlaneseq
        %v477 = vshrl.u32 %v476, 7
        %v478 = vsub.s32 0, %v477
        %v479 = vrot.slane %v474, %v478
        %v483 = vunpack.c.l.b16 %v456
        %v484 = vunpack.c.l.b16 %v457
        %v485 = vpack.c.b16 %v484, %v483
        %v503 = vunpack.c.l.b16 %v458
        %v504 = vunpack.c.l.b16 %v459
        %v505 = vunpack.c.l.b16 %v460
        %v506 = vunpack.c.l.b16 %v461
        %v507 = vunpack.c.l.b16 %v462
        %v508 = vunpack.c.l.b16 %v463
        %v509 = vunpack.c.l.b16 %v464
        %v510 = vunpack.c.l.b16 %v465
        %v511 = vunpack.c.l.b16 %v466
        %v512 = vunpack.c.l.b16 %v467
        %v513 = vunpack.c.l.b16 %v468
        %v514 = vunpack.c.l.b16 %v469
        %v515 = vunpack.c.l.b16 %v470
        %v516 = vunpack.c.l.b16 %v471
        %v517 = vunpack.c.l.b16 %v472
        %v518 = vunpack.c.l.b16 %v473
        %v519 = vpack.c.b16 %v504, %v503
        %v520 = vpack.c.b16 %v506, %v505
        %v521 = vpack.c.b16 %v508, %v507
        %v522 = vpack.c.b16 %v510, %v509
        %v523 = vpack.c.b16 %v512, %v511
        %v524 = vpack.c.b16 %v514, %v513
        %v525 = vpack.c.b16 %v516, %v515
        %v526 = vpack.c.b16 %v518, %v517
        %535 = vmatprep.subr.bf16.mxu0 0
        %536 = vmatpush1.bf16.msra.mxu0 %v519
        %537 = vmatprep.subr.bf16.mxu0 0
        %538 = vmatpush1.bf16.msra.mxu0 %v520
        %539 = vmatprep.subr.bf16.mxu0 0
        %540 = vmatpush1.bf16.msra.mxu0 %v521
        %541 = vmatprep.subr.bf16.mxu0 0
        %542 = vmatpush1.bf16.msra.mxu0 %v522
        %543 = vmatprep.subr.bf16.mxu0 0
        %544 = vmatpush1.bf16.msra.mxu0 %v523
        %545 = vmatprep.subr.bf16.mxu0 0
        %546 = vmatpush1.bf16.msra.mxu0 %v524
        %547 = vmatprep.subr.bf16.mxu0 0
        %548 = vmatpush1.bf16.msra.mxu0 %v525
        %549 = vmatprep.subr.bf16.mxu0 0
        %550 = vmatpush1.bf16.msra.mxu0 %v526
        %551 = vmatprep.subr.bf16.mxu0 0
        %552 = vmatpush1.bf16.msra.mxu0 0
        %553 = vmatprep.subr.bf16.mxu0 0
        %554 = vmatpush1.bf16.msra.mxu0 0
        %555 = vmatprep.subr.bf16.mxu0 0
        %556 = vmatpush1.bf16.msra.mxu0 0
        %557 = vmatprep.subr.bf16.mxu0 0
        %558 = vmatpush1.bf16.msra.mxu0 0
        %559 = vmatprep.subr.bf16.mxu0 0
        %560 = vmatpush1.bf16.msra.mxu0 0
        %561 = vmatprep.subr.bf16.mxu0 0
        %562 = vmatpush1.bf16.msra.mxu0 0
        %563 = vmatprep.subr.bf16.mxu0 0
        %564 = vmatpush1.bf16.msra.mxu0 0
        %565 = vmatprep.subr.bf16.mxu0 0
        %566 = vmatpush1.bf16.msra.mxu0 0
        %567 = vmatprep.mubr.bf16.mxu0 0
        %568 = vmatmul.mubr.bf16.gmra.mrb[0].mxu0 %v485
        %v569 = vpop.f32.mrb[0].mxu0
        %v570 = vadd.f32 %v479, %v569
        %v571 = vpop.f32.mrb[0].mxu0
        %v572 = vpop.f32.mrb[0].mxu0
        %v573 = vadd.f32 %v479, %v572
        %v574 = vpop.f32.mrb[0].mxu0
        %575 = vdwg.mxu0
        %v576 = vpack.c.bf16 %v573, %v570
        %577 = vst [vmem:[#allocation2] sm:$0xff] %v576
        %vm578 = vcmask 7168
        %579 = vst.msk [vmem:[#allocation3] sm:$0xff] %vm578, -1e+30
        %580 = vst.msk [vmem:[#allocation3 + $0x8] sm:$0xff] %vm578, -1e+30
        %581 = vst.msk [vmem:[#allocation4] sm:$0xff] %vm578, 0.0
        %582 = vst.msk [vmem:[#allocation4 + $0x8] sm:$0xff] %vm578, 0.0
        %583 = vst [vmem:[#allocation5] sm:$0xff] 0.0
        %584 = vst [vmem:[#allocation5 + $0x8] sm:$0xff] 0.0
      $region60: #{attention_forward.1} parent=55 // pred_fallthru
        _
      %v585 = vld [vmem:[%s429] sm:$0xf]
      %v586 = vld [vmem:[%s429 + $0x4] sm:$0xf]
      %v587 = vld [vmem:[%s429 + $0x8] sm:$0xf]
      %v588 = vld [vmem:[%s429 + $0xc] sm:$0xf]
      %v589 = vld [vmem:[%s429 + $0x10] sm:$0xf]
      %v590 = vld [vmem:[%s429 + $0x14] sm:$0xf]
      %v591 = vld [vmem:[%s429 + $0x18] sm:$0xf]
      %v592 = vld [vmem:[%s429 + $0x1c] sm:$0xf]
      %v593 = vld [vmem:[%s429 + $0x20] sm:$0xf]
      %v594 = vld [vmem:[%s429 + $0x24] sm:$0xf]
      %v595 = vld [vmem:[%s429 + $0x28] sm:$0xf]
      %v596 = vld [vmem:[%s429 + $0x2c] sm:$0xf]
      %v597 = vld [vmem:[%s429 + $0x30] sm:$0xf]
      %v598 = vld [vmem:[%s429 + $0x34] sm:$0xf]
      %v599 = vld [vmem:[%s429 + $0x38] sm:$0xf]
      %v600 = vld [vmem:[%s429 + $0x3c] sm:$0xf]
      %v601 = vld [vmem:[%s5] sm:$0xf]
      %v602 = vld [vmem:[%s5 + $0x4] sm:$0xf]
      %v603 = vld [vmem:[%s5 + $0x8] sm:$0xf]
      %v604 = vld [vmem:[%s5 + $0xc] sm:$0xf]
      %v605 = vld [vmem:[%s5 + $0x10] sm:$0xf]
      %v606 = vld [vmem:[%s5 + $0x14] sm:$0xf]
      %v607 = vld [vmem:[%s5 + $0x18] sm:$0xf]
      %v608 = vld [vmem:[%s5 + $0x1c] sm:$0xf]
      %v609 = vld [vmem:[%s5 + $0x20] sm:$0xf]
      %v610 = vld [vmem:[%s5 + $0x24] sm:$0xf]
      %v611 = vld [vmem:[%s5 + $0x28] sm:$0xf]
      %v612 = vld [vmem:[%s5 + $0x2c] sm:$0xf]
      %v613 = vld [vmem:[%s5 + $0x30] sm:$0xf]
      %v614 = vld [vmem:[%s5 + $0x34] sm:$0xf]
      %v615 = vld [vmem:[%s5 + $0x38] sm:$0xf]
      %v616 = vld [vmem:[%s5 + $0x3c] sm:$0xf]
      %v617 = vld [vmem:[%s6] sm:$0x1]
      %v619 = vlaneseq
      %v620 = vshrl.u32 %v619, 7
      %v621 = vsub.s32 0, %v620
      %v622 = vrot.slane %v617, %v621
      %v640 = vunpack.c.l.b16 %v585
      %v641 = vunpack.c.l.b16 %v586
      %v642 = vunpack.c.l.b16 %v587
      %v643 = vunpack.c.l.b16 %v588
      %v644 = vunpack.c.l.b16 %v589
      %v645 = vunpack.c.l.b16 %v590
      %v646 = vunpack.c.l.b16 %v591
      %v647 = vunpack.c.l.b16 %v592
      %v648 = vunpack.c.l.b16 %v593
      %v649 = vunpack.c.l.b16 %v594
      %v650 = vunpack.c.l.b16 %v595
      %v651 = vunpack.c.l.b16 %v596
      %v652 = vunpack.c.l.b16 %v597
      %v653 = vunpack.c.l.b16 %v598
      %v654 = vunpack.c.l.b16 %v599
      %v655 = vunpack.c.l.b16 %v600
      %v656 = vpack.c.b16 %v641, %v640
      %v657 = vpack.c.b16 %v643, %v642
      %v658 = vpack.c.b16 %v645, %v644
      %v659 = vpack.c.b16 %v647, %v646
      %v660 = vpack.c.b16 %v649, %v648
      %v661 = vpack.c.b16 %v651, %v650
      %v662 = vpack.c.b16 %v653, %v652
      %v663 = vpack.c.b16 %v655, %v654
      %v688 = vunpack.c.l.b16 %v601
      %v689 = vunpack.c.l.b16 %v602
      %v690 = vunpack.c.l.b16 %v603
      %v691 = vunpack.c.l.b16 %v604
      %v692 = vunpack.c.l.b16 %v605
      %v693 = vunpack.c.l.b16 %v606
      %v694 = vunpack.c.l.b16 %v607
      %v695 = vunpack.c.l.b16 %v608
      %v696 = vunpack.c.l.b16 %v609
      %v697 = vunpack.c.l.b16 %v610
      %v698 = vunpack.c.l.b16 %v611
      %v699 = vunpack.c.l.b16 %v612
      %v700 = vunpack.c.l.b16 %v613
      %v701 = vunpack.c.l.b16 %v614
      %v702 = vunpack.c.l.b16 %v615
      %v703 = vunpack.c.l.b16 %v616
      %v704 = vpack.c.b16 %v689, %v688
      %v705 = vpack.c.b16 %v691, %v690
      %v706 = vpack.c.b16 %v693, %v692
      %v707 = vpack.c.b16 %v695, %v694
      %v708 = vpack.c.b16 %v697, %v696
      %v709 = vpack.c.b16 %v699, %v698
      %v710 = vpack.c.b16 %v701, %v700
      %v711 = vpack.c.b16 %v703, %v702
      %720 = vmatprep.subr.bf16.mxu0 0
      %721 = vmatpush1.bf16.msra.mxu0 %v704
      %722 = vmatprep.subr.bf16.mxu0 0
      %723 = vmatpush1.bf16.msra.mxu0 %v705
      %724 = vmatprep.subr.bf16.mxu0 0
      %725 = vmatpush1.bf16.msra.mxu0 %v706
      %726 = vmatprep.subr.bf16.mxu0 0
      %727 = vmatpush1.bf16.msra.mxu0 %v707
      %728 = vmatprep.subr.bf16.mxu0 0
      %729 = vmatpush1.bf16.msra.mxu0 %v708
      %730 = vmatprep.subr.bf16.mxu0 0
      %731 = vmatpush1.bf16.msra.mxu0 %v709
      %732 = vmatprep.subr.bf16.mxu0 0
      %733 = vmatpush1.bf16.msra.mxu0 %v710
      %734 = vmatprep.subr.bf16.mxu0 0
      %735 = vmatpush1.bf16.msra.mxu0 %v711
      %736 = vmatprep.subr.bf16.mxu0 0
      %737 = vmatpush1.bf16.msra.mxu0 0
      %738 = vmatprep.subr.bf16.mxu0 0
      %739 = vmatpush1.bf16.msra.mxu0 0
      %740 = vmatprep.subr.bf16.mxu0 0
      %741 = vmatpush1.bf16.msra.mxu0 0
      %742 = vmatprep.subr.bf16.mxu0 0
      %743 = vmatpush1.bf16.msra.mxu0 0
      %744 = vmatprep.subr.bf16.mxu0 0
      %745 = vmatpush1.bf16.msra.mxu0 0
      %746 = vmatprep.subr.bf16.mxu0 0
      %747 = vmatpush1.bf16.msra.mxu0 0
      %748 = vmatprep.subr.bf16.mxu0 0
      %749 = vmatpush1.bf16.msra.mxu0 0
      %750 = vmatprep.subr.bf16.mxu0 0
      %751 = vmatpush1.bf16.msra.mxu0 0
      %752 = vmatprep.mubr.bf16.mxu0 0
      %753 = vmatmul.mubr.bf16.gmra.mrb[0].mxu0 %v656
      %v754 = vpop.f32.mrb[0].mxu0
      %v755 = vadd.f32 %v622, %v754
      %v756 = vpop.f32.mrb[0].mxu0
      %v757 = vpop.f32.mrb[0].mxu0
      %v758 = vadd.f32 %v622, %v757
      %v759 = vpop.f32.mrb[0].mxu0
      %760 = vmatprep.mubr.bf16.mxu0 0
      %761 = vmatmul.mubr.bf16.gmra.mrb[0].mxu0 %v657
      %v762 = vpop.f32.mrb[0].mxu0
      %v763 = vadd.f32 %v622, %v762
      %v764 = vpop.f32.mrb[0].mxu0
      %v765 = vpop.f32.mrb[0].mxu0
      %v766 = vadd.f32 %v622, %v765
      %v767 = vpop.f32.mrb[0].mxu0
      %768 = vmatprep.mubr.bf16.mxu0 0
      %769 = vmatmul.mubr.bf16.gmra.mrb[0].mxu0 %v658
      %v770 = vpop.f32.mrb[0].mxu0
      %v771 = vadd.f32 %v622, %v770
      %v772 = vpop.f32.mrb[0].mxu0
      %v773 = vpop.f32.mrb[0].mxu0
      %v774 = vadd.f32 %v622, %v773
      %v775 = vpop.f32.mrb[0].mxu0
      %776 = vmatprep.mubr.bf16.mxu0 0
      %777 = vmatmul.mubr.bf16.gmra.mrb[0].mxu0 %v659
      %v778 = vpop.f32.mrb[0].mxu0
      %v779 = vadd.f32 %v622, %v778
      %v780 = vpop.f32.mrb[0].mxu0
      %v781 = vpop.f32.mrb[0].mxu0
      %v782 = vadd.f32 %v622, %v781
      %v783 = vpop.f32.mrb[0].mxu0
      %784 = vmatprep.mubr.bf16.mxu0 0
      %785 = vmatmul.mubr.bf16.gmra.mrb[0].mxu0 %v660
      %v786 = vpop.f32.mrb[0].mxu0
      %v787 = vadd.f32 %v622, %v786
      %v788 = vpop.f32.mrb[0].mxu0
      %v789 = vpop.f32.mrb[0].mxu0
      %v790 = vadd.f32 %v622, %v789
      %v791 = vpop.f32.mrb[0].mxu0
      %792 = vmatprep.mubr.bf16.mxu0 0
      %793 = vmatmul.mubr.bf16.gmra.mrb[0].mxu0 %v661
      %v794 = vpop.f32.mrb[0].mxu0
      %v795 = vadd.f32 %v622, %v794
      %v796 = vpop.f32.mrb[0].mxu0
      %v797 = vpop.f32.mrb[0].mxu0
      %v798 = vadd.f32 %v622, %v797
      %v799 = vpop.f32.mrb[0].mxu0
      %800 = vmatprep.mubr.bf16.mxu0 0
      %801 = vmatmul.mubr.bf16.gmra.mrb[0].mxu0 %v662
      %v802 = vpop.f32.mrb[0].mxu0
      %v803 = vadd.f32 %v622, %v802
      %v804 = vpop.f32.mrb[0].mxu0
      %v805 = vpop.f32.mrb[0].mxu0
      %v806 = vadd.f32 %v622, %v805
      %v807 = vpop.f32.mrb[0].mxu0
      %808 = vmatprep.mubr.bf16.mxu0 0
      %809 = vmatmul.mubr.bf16.gmra.mrb[0].mxu0 %v663
      %v810 = vpop.f32.mrb[0].mxu0
      %v811 = vadd.f32 %v622, %v810
      %v812 = vpop.f32.mrb[0].mxu0
      %v813 = vpop.f32.mrb[0].mxu0
      %v814 = vadd.f32 %v622, %v813
      %v815 = vpop.f32.mrb[0].mxu0
      %816 = vdwg.mxu0
      %v817 = vpack.c.bf16 %v758, %v755
      %v818 = vpack.c.bf16 %v766, %v763
      %v819 = vpack.c.bf16 %v774, %v771
      %v820 = vpack.c.bf16 %v782, %v779
      %v821 = vpack.c.bf16 %v790, %v787
      %v822 = vpack.c.bf16 %v798, %v795
      %v823 = vpack.c.bf16 %v806, %v803
      %v824 = vpack.c.bf16 %v814, %v811
      %v825 = vld [vmem:[#allocation2] sm:$0xff]
      %826 = vmatprep.subr.bf16.mxu0 0
      %827 = vmatpush1.bf16.xpose.msra.mxu0 %v817
      %828 = vmatprep.subr.bf16.mxu0 0
      %829 = vmatpush1.bf16.xpose.msra.mxu0 %v818
      %830 = vmatprep.subr.bf16.mxu0 0
      %831 = vmatpush1.bf16.xpose.msra.mxu0 %v819
      %832 = vmatprep.subr.bf16.mxu0 0
      %833 = vmatpush1.bf16.xpose.msra.mxu0 %v820
      %834 = vmatprep.subr.bf16.mxu0 0
      %835 = vmatpush1.bf16.xpose.msra.mxu0 %v821
      %836 = vmatprep.subr.bf16.mxu0 0
      %837 = vmatpush1.bf16.xpose.msra.mxu0 %v822
      %838 = vmatprep.subr.bf16.mxu0 0
      %839 = vmatpush1.bf16.xpose.msra.mxu0 %v823
      %840 = vmatprep.subr.bf16.mxu0 0
      %841 = vmatpush1.bf16.xpose.msra.mxu0 %v824
      %842 = vmatprep.subr.bf16.mxu0 0
      %843 = vmatpush1.bf16.xpose.msra.mxu0 0
      %844 = vmatprep.subr.bf16.mxu0 0
      %845 = vmatpush1.bf16.xpose.msra.mxu0 0
      %846 = vmatprep.subr.bf16.mxu0 0
      %847 = vmatpush1.bf16.xpose.msra.mxu0 0
      %848 = vmatprep.subr.bf16.mxu0 0
      %849 = vmatpush1.bf16.xpose.msra.mxu0 0
      %850 = vmatprep.subr.bf16.mxu0 0
      %851 = vmatpush1.bf16.xpose.msra.mxu0 0
      %852 = vmatprep.subr.bf16.mxu0 0
      %853 = vmatpush1.bf16.xpose.msra.mxu0 0
      %854 = vmatprep.subr.bf16.mxu0 0
      %855 = vmatpush1.bf16.xpose.msra.mxu0 0
      %856 = vmatprep.subr.bf16.mxu0 0
      %857 = vmatpush1.bf16.xpose.msra.mxu0 0
      %858 = vmatprep.mubr.bf16.mxu0 0
      %859 = vmatmul.mubr.bf16.gmra.mrb[0].mxu0 %v825
      %v860 = vpop.f32.mrb[0].mxu0
      %v861 = vadd.f32 0.0, %v860
      %v862 = vpop.f32.mrb[0].mxu0
      %v863 = vpop.f32.mrb[0].mxu0
      %v864 = vadd.f32 0.0, %v863
      %v865 = vpop.f32.mrb[0].mxu0
      %866 = vdwg.mxu0
      %s867 = smul.u32 %s27, 128
      %v868 = vlaneseq
      %v869 = vand.u32 %v868, 127
      %v870 = vstv %s867
      %v871 = vadd.s32 %v870, %v869
      %vm872 = vcmp.lt.s32.totalorder %v871, 16
      %v873 = vsel %vm872, %v861, -1e+30
      %v874 = vsel %vm872, %v864, -1e+30
      %v875 = vld [vmem:[#allocation3] sm:$0xff]
      %v876 = vld [vmem:[#allocation3 + $0x8] sm:$0xff]
      %877 = vmax.xlane.f32.xlu0 %v873
      %v878 = vpop.xlane.xlu0 %877
      %879 = vmax.xlane.f32.xlu0 %v874
      %v880 = vpop.xlane.xlu0 %879
      %v881 = vmax.f32 %v875, %v878
      %v882 = vmax.f32 %v876, %v880
      %v883 = vsub.f32 %v875, %v881
      %v884 = vsub.f32 %v876, %v882
      %v885 = vmul.f32 %v883, 1.442695
      %v886 = vpow.pop %v885
      %v887 = vmul.f32 %v884, 1.442695
      %v888 = vpow.pop %v887
      %890 = vset.pattern.permute.xlu0 0
      %891 = vperm.xlu0 %890, %v881
      %v892 = vpop.permute.xlu0 %891
      %895 = vset.pattern.permute.xlu0 0
      %896 = vperm.xlu0 %895, %v882
      %v897 = vpop.permute.xlu0 %896
      %v899 = vsub.f32 %v873, %v892
      %v900 = vsub.f32 %v874, %v897
      %v901 = vmul.f32 %v899, 1.442695
      %v902 = vpow.pop %v901
      %v903 = vmul.f32 %v900, 1.442695
      %v904 = vpow.pop %v903
      %v905 = vld [vmem:[#allocation4] sm:$0xff]
      %v906 = vld [vmem:[#allocation4 + $0x8] sm:$0xff]
      %v907 = vmul.f32 %v886, %v905
      %v908 = vmul.f32 %v888, %v906
      %909 = vadd.xlane.f32.xlu0 %v902
      %v910 = vpop.xlane.xlu0 %909
      %911 = vadd.xlane.f32.xlu0 %v904
      %v912 = vpop.xlane.xlu0 %911
      %v913 = vadd.f32 %v907, %v910
      %v914 = vadd.f32 %v908, %v912
      %vm915 = vcmask 7168
      %916 = vst.msk [vmem:[#allocation4] sm:$0xff] %vm915, %v913
      %917 = vst.msk [vmem:[#allocation4 + $0x8] sm:$0xff] %vm915, %v914
      %v918 = vld [vmem:[#allocation5] sm:$0xff]
      %v919 = vld [vmem:[#allocation5 + $0x8] sm:$0xff]
      %921 = vset.pattern.permute.xlu0 0
      %922 = vperm.xlu0 %921, %v886
      %v923 = vpop.permute.xlu0 %922
      %926 = vset.pattern.permute.xlu0 0
      %927 = vperm.xlu0 %926, %v888
      %v928 = vpop.permute.xlu0 %927
      %v930 = vmul.f32 %v923, %v918
      %v931 = vmul.f32 %v928, %v919
      %v932 = vpack.c.bf16 %v904, %v902
      %v933 = vld [vmem:[%s439] sm:$0xf]
      %v934 = vld [vmem:[%s439 + $0x4] sm:$0xf]
      %v935 = vld [vmem:[%s439 + $0x8] sm:$0xf]
      %v936 = vld [vmem:[%s439 + $0xc] sm:$0xf]
      %v937 = vld [vmem:[%s439 + $0x10] sm:$0xf]
      %v938 = vld [vmem:[%s439 + $0x14] sm:$0xf]
      %v939 = vld [vmem:[%s439 + $0x18] sm:$0xf]
      %v940 = vld [vmem:[%s439 + $0x1c] sm:$0xf]
      %v941 = vld [vmem:[%s439 + $0x20] sm:$0xf]
      %v942 = vld [vmem:[%s439 + $0x24] sm:$0xf]
      %v943 = vld [vmem:[%s439 + $0x28] sm:$0xf]
      %v944 = vld [vmem:[%s439 + $0x2c] sm:$0xf]
      %v945 = vld [vmem:[%s439 + $0x30] sm:$0xf]
      %v946 = vld [vmem:[%s439 + $0x34] sm:$0xf]
      %v947 = vld [vmem:[%s439 + $0x38] sm:$0xf]
      %v948 = vld [vmem:[%s439 + $0x3c] sm:$0xf]
      %v965 = vunpack.c.l.b16 %v933
      %v966 = vunpack.c.l.b16 %v934
      %v967 = vunpack.c.l.b16 %v935
      %v968 = vunpack.c.l.b16 %v936
      %v969 = vunpack.c.l.b16 %v937
      %v970 = vunpack.c.l.b16 %v938
      %v971 = vunpack.c.l.b16 %v939
      %v972 = vunpack.c.l.b16 %v940
      %v973 = vunpack.c.l.b16 %v941
      %v974 = vunpack.c.l.b16 %v942
      %v975 = vunpack.c.l.b16 %v943
      %v976 = vunpack.c.l.b16 %v944
      %v977 = vunpack.c.l.b16 %v945
      %v978 = vunpack.c.l.b16 %v946
      %v979 = vunpack.c.l.b16 %v947
      %v980 = vunpack.c.l.b16 %v948
      %v981 = vpack.c.b16 %v966, %v965
      %v982 = vpack.c.b16 %v968, %v967
      %v983 = vpack.c.b16 %v970, %v969
      %v984 = vpack.c.b16 %v972, %v971
      %v985 = vpack.c.b16 %v974, %v973
      %v986 = vpack.c.b16 %v976, %v975
      %v987 = vpack.c.b16 %v978, %v977
      %v988 = vpack.c.b16 %v980, %v979
      %997 = vmatprep.subr.bf16.mxu0 0
      %998 = vmatpush1.bf16.msra.mxu0 %v981
      %999 = vmatprep.subr.bf16.mxu0 0
      %1000 = vmatpush1.bf16.msra.mxu0 %v982
      %1001 = vmatprep.subr.bf16.mxu0 0
      %1002 = vmatpush1.bf16.msra.mxu0 %v983
      %1003 = vmatprep.subr.bf16.mxu0 0
      %1004 = vmatpush1.bf16.msra.mxu0 %v984
      %1005 = vmatprep.subr.bf16.mxu0 0
      %1006 = vmatpush1.bf16.msra.mxu0 %v985
      %1007 = vmatprep.subr.bf16.mxu0 0
      %1008 = vmatpush1.bf16.msra.mxu0 %v986
      %1009 = vmatprep.subr.bf16.mxu0 0
      %1010 = vmatpush1.bf16.msra.mxu0 %v987
      %1011 = vmatprep.subr.bf16.mxu0 0
      %1012 = vmatpush1.bf16.msra.mxu0 %v988
      %1013 = vmatprep.subr.bf16.mxu0 0
      %1014 = vmatpush1.bf16.msra.mxu0 0
      %1015 = vmatprep.subr.bf16.mxu0 0
      %1016 = vmatpush1.bf16.msra.mxu0 0
      %1017 = vmatprep.subr.bf16.mxu0 0
      %1018 = vmatpush1.bf16.msra.mxu0 0
      %1019 = vmatprep.subr.bf16.mxu0 0
      %1020 = vmatpush1.bf16.msra.mxu0 0
      %1021 = vmatprep.subr.bf16.mxu0 0
      %1022 = vmatpush1.bf16.msra.mxu0 0
      %1023 = vmatprep.subr.bf16.mxu0 0
      %1024 = vmatpush1.bf16.msra.mxu0 0
      %1025 = vmatprep.subr.bf16.mxu0 0
      %1026 = vmatpush1.bf16.msra.mxu0 0
      %1027 = vmatprep.subr.bf16.mxu0 0
      %1028 = vmatpush1.bf16.msra.mxu0 0
      %1029 = vmatprep.mubr.bf16.mxu0 0
      %1030 = vmatmul.mubr.bf16.gmra.mrb[0].mxu0 %v932
      %v1031 = vpop.f32.mrb[0].mxu0
      %v1032 = vadd.f32 0.0, %v1031
      %v1033 = vpop.f32.mrb[0].mxu0
      %v1034 = vpop.f32.mrb[0].mxu0
      %v1035 = vadd.f32 0.0, %v1034
      %v1036 = vpop.f32.mrb[0].mxu0
      %1037 = vdwg.mxu0
      %v1038 = vadd.f32 %v930, %v1032
      %v1039 = vadd.f32 %v931, %v1035
      %1040 = vst [vmem:[#allocation5] sm:$0xff] %v1038
      %1041 = vst [vmem:[#allocation5 + $0x8] sm:$0xff] %v1039
      %1042 = vst.msk [vmem:[#allocation3] sm:$0xff] %vm915, %v881
      %1043 = vst.msk [vmem:[#allocation3 + $0x8] sm:$0xff] %vm915, %v882
      // Predicated region
      $region61: #{attention_forward.1} parent=55 // pred_check
        %p1044 = pneg %p452
      $region62: #{attention_forward.1} parent=55 // pred_check_branch
        %1046 = sbr.rel (%p1044) target = $region64
      $region63: #{attention_forward.1} parent=55 // pred_region
        %v1047 = vld [vmem:[#allocation5] sm:$0xff]
        %v1048 = vld [vmem:[#allocation5 + $0x8] sm:$0xff]
        %v1049 = vld [vmem:[#allocation4] sm:$0xff]
        %v1050 = vld [vmem:[#allocation4 + $0x8] sm:$0xff]
        %v1051 = vrcp.pop %v1049
        %v1052 = vrcp.pop %v1050
        %1054 = vset.pattern.permute.xlu0 0
        %1055 = vperm.xlu0 %1054, %v1051
        %v1056 = vpop.permute.xlu0 %1055
        %1059 = vset.pattern.permute.xlu0 0
        %1060 = vperm.xlu0 %1059, %v1052
        %v1061 = vpop.permute.xlu0 %1060
        %v1063 = vmul.f32 %v1047, %v1056
        %v1064 = vmul.f32 %v1048, %v1061
        %v1065 = vpack.c.bf16 %v1064, %v1063
        %v1066 = vld [vmem:[%s7] sm:$0xf]
        %v1067 = vld [vmem:[%s7 + $0x4] sm:$0xf]
        %v1068 = vld [vmem:[%s7 + $0x8] sm:$0xf]
        %v1069 = vld [vmem:[%s7 + $0xc] sm:$0xf]
        %v1070 = vld [vmem:[%s7 + $0x10] sm:$0xf]
        %v1071 = vld [vmem:[%s7 + $0x14] sm:$0xf]
        %v1072 = vld [vmem:[%s7 + $0x18] sm:$0xf]
        %v1073 = vld [vmem:[%s7 + $0x1c] sm:$0xf]
        %v1074 = vld [vmem:[%s7 + $0x20] sm:$0xf]
        %v1075 = vld [vmem:[%s7 + $0x24] sm:$0xf]
        %v1076 = vld [vmem:[%s7 + $0x28] sm:$0xf]
        %v1077 = vld [vmem:[%s7 + $0x2c] sm:$0xf]
        %v1078 = vld [vmem:[%s7 + $0x30] sm:$0xf]
        %v1079 = vld [vmem:[%s7 + $0x34] sm:$0xf]
        %v1080 = vld [vmem:[%s7 + $0x38] sm:$0xf]
        %v1081 = vld [vmem:[%s7 + $0x3c] sm:$0xf]
        %v1082 = vld [vmem:[%s8] sm:$0x1]
        %v1084 = vlaneseq
        %v1085 = vshrl.u32 %v1084, 7
        %v1086 = vsub.s32 0, %v1085
        %v1087 = vrot.slane %v1082, %v1086
        %v1105 = vunpack.c.l.b16 %v1066
        %v1106 = vunpack.c.l.b16 %v1067
        %v1107 = vunpack.c.l.b16 %v1068
        %v1108 = vunpack.c.l.b16 %v1069
        %v1109 = vunpack.c.l.b16 %v1070
        %v1110 = vunpack.c.l.b16 %v1071
        %v1111 = vunpack.c.l.b16 %v1072
        %v1112 = vunpack.c.l.b16 %v1073
        %v1113 = vunpack.c.l.b16 %v1074
        %v1114 = vunpack.c.l.b16 %v1075
        %v1115 = vunpack.c.l.b16 %v1076
        %v1116 = vunpack.c.l.b16 %v1077
        %v1117 = vunpack.c.l.b16 %v1078
        %v1118 = vunpack.c.l.b16 %v1079
        %v1119 = vunpack.c.l.b16 %v1080
        %v1120 = vunpack.c.l.b16 %v1081
        %v1121 = vpack.c.b16 %v1106, %v1105
        %v1122 = vpack.c.b16 %v1108, %v1107
        %v1123 = vpack.c.b16 %v1110, %v1109
        %v1124 = vpack.c.b16 %v1112, %v1111
        %v1125 = vpack.c.b16 %v1114, %v1113
        %v1126 = vpack.c.b16 %v1116, %v1115
        %v1127 = vpack.c.b16 %v1118, %v1117
        %v1128 = vpack.c.b16 %v1120, %v1119
        %1137 = vmatprep.subr.bf16.mxu0 0
        %1138 = vmatpush1.bf16.msra.mxu0 %v1121
        %1139 = vmatprep.subr.bf16.mxu0 0
        %1140 = vmatpush1.bf16.msra.mxu0 %v1122
        %1141 = vmatprep.subr.bf16.mxu0 0
        %1142 = vmatpush1.bf16.msra.mxu0 %v1123
        %1143 = vmatprep.subr.bf16.mxu0 0
        %1144 = vmatpush1.bf16.msra.mxu0 %v1124
        %1145 = vmatprep.subr.bf16.mxu0 0
        %1146 = vmatpush1.bf16.msra.mxu0 %v1125
        %1147 = vmatprep.subr.bf16.mxu0 0
        %1148 = vmatpush1.bf16.msra.mxu0 %v1126
        %1149 = vmatprep.subr.bf16.mxu0 0
        %1150 = vmatpush1.bf16.msra.mxu0 %v1127
        %1151 = vmatprep.subr.bf16.mxu0 0
        %1152 = vmatpush1.bf16.msra.mxu0 %v1128
        %1153 = vmatprep.subr.bf16.mxu0 0
        %1154 = vmatpush1.bf16.msra.mxu0 0
        %1155 = vmatprep.subr.bf16.mxu0 0
        %1156 = vmatpush1.bf16.msra.mxu0 0
        %1157 = vmatprep.subr.bf16.mxu0 0
        %1158 = vmatpush1.bf16.msra.mxu0 0
        %1159 = vmatprep.subr.bf16.mxu0 0
        %1160 = vmatpush1.bf16.msra.mxu0 0
        %1161 = vmatprep.subr.bf16.mxu0 0
        %1162 = vmatpush1.bf16.msra.mxu0 0
        %1163 = vmatprep.subr.bf16.mxu0 0
        %1164 = vmatpush1.bf16.msra.mxu0 0
        %1165 = vmatprep.subr.bf16.mxu0 0
        %1166 = vmatpush1.bf16.msra.mxu0 0
        %1167 = vmatprep.subr.bf16.mxu0 0
        %1168 = vmatpush1.bf16.msra.mxu0 0
        %1169 = vmatprep.mubr.bf16.mxu0 0
        %1170 = vmatmul.mubr.bf16.gmra.mrb[0].mxu0 %v1065
        %v1171 = vpop.f32.mrb[0].mxu0
        %v1172 = vadd.f32 %v1087, %v1171
        %v1173 = vpop.f32.mrb[0].mxu0
        %v1174 = vpop.f32.mrb[0].mxu0
        %v1175 = vadd.f32 %v1087, %v1174
        %v1176 = vpop.f32.mrb[0].mxu0
        %1177 = vdwg.mxu0
        %1178 = vst [vmem:[%s449] sm:$0xff] %v1172
        %1179 = vst [vmem:[%s449 + $0x8] sm:$0xff] %v1175
      $region64: #{attention_forward.1} parent=55 // pred_fallthru
        _
      %s1180 = smul.u32 2, %s26
      %p1181 = scmp.lt.s32.totalorder %s25, 1
      %s1182 = scalar_select %p1181, %s25, 1
      %p1183 = scmp.lt.s32.totalorder %s1180, 1
      %s1184 = scalar_select %p1183, %s1180, 1
      %s1185 = smul.addr %s1182, 2
      %s1186 = sadd.s32 %s1184, %s1185
      %s1187 = smul.addr %s1186, 8
      %s1188 = scalar_lea.vmem %s9, %s1187
      // Predicated region
      $region65: #{attention_forward.1} parent=55 // pred_check
        %p1189 = pneg %p269
      $region66: #{attention_forward.1} parent=55 // pred_check_branch
        %1191 = sbr.rel (%p1189) target = $region68
      $region67: #{attention_forward.1} parent=55 // pred_region
        %s1192 = smul.u32 2, %s26
      $region68: #{attention_forward.1} parent=55 // pred_fallthru
        _
    $region56: #{attention_forward.1} parent=5 // pred_fallthru
      _
    %p1193 = scmp.le.s32.totalorder 2, %s15
    // Predicated region
    $region69: #{attention_forward.1} parent=5 // pred_check
      %p1194 = pneg %p1193
    $region70: #{attention_forward.1} parent=5 // pred_check_branch
      %1196 = sbr.rel (%p1194) target = $region72
    $region71: #{attention_forward.1} parent=5 // pred_region
      %s1197 = ssub.s32 %s15, 2
      // Predicated region
      $region73: #{attention_forward.1} parent=71 // pred_check
        %p1198 = pneg %p275
      $region74: #{attention_forward.1} parent=71 // pred_check_branch
        %1200 = sbr.rel (%p1198) target = $region76
      $region75: #{attention_forward.1} parent=71 // pred_region
        %s1201 = smul.u32 2, %s29
        %p1202 = scmp.lt.s32.totalorder %s28, 1
        %s1203 = scalar_select %p1202, %s28, 1
        %p1204 = scmp.lt.s32.totalorder %s1201, 1
        %s1205 = scalar_select %p1204, %s1201, 1
        %s1206 = smul.addr %s1203, 2
        %s1207 = sadd.s32 %s1205, %s1206
        %s1208 = smul.addr %s1207, 8
        %s1209 = scalar_lea.vmem %s9, %s1208
      $region76: #{attention_forward.1} parent=71 // pred_fallthru
        _
    $region72: #{attention_forward.1} parent=5 // pred_fallthru
      _
  $region6: #{attention_forward.1} parent=0 // loop_footer
    %s19 = sadd.s32 1, %s15
  $region7: #{attention_forward.1} parent=0 // loop_footer_branch
    %14 = sbr.rel target = $region3
  $region8: #{attention_forward.1} parent=0 // loop_exit
    _

</llo_original>
